<compile_context>
chip_gen: v7x
topology: tpu7x:2x2x1
jax: 0.10.0
libtpu: 0.0.40
codegen_flags: <defaults>
</compile_context>

<pallas_src>
import functools

import jax
import jax.numpy as jnp
from jax import lax
from jax.experimental import pallas as pl
from jax.experimental.pallas import tpu as pltpu

_MASK_VALUE = -1e30  # large finite negative; exp(masked - max) underflows to 0.


def _round_up(v, m):
    return ((v + m - 1) // m) * m


def _vmem_capacity_bytes():
    """Per-core VMEM capacity; conservative (v7x) default if query fails."""
    try:
        info = pltpu.get_tpu_info()
        cap = getattr(info, "vmem_capacity_bytes", None)
        if cap:
            return int(cap)
    except Exception:
        pass
    return 64 * 2 ** 20


# ---------------------------------------------------------------------------
# Shared per-layer attention body (works on refs; T query rows, N key nodes).
# ---------------------------------------------------------------------------
def _attend(gk_ref, gq_ref, dsel_ref, bias_ref, out_ref, *,
            n_heads, n_hidden, slope, apply_elu):
    """One GAT attention layer for a tile of query rows.

    gk_ref : (N, hd + H)  [g | a_src] for ALL nodes (keys / values).
    gq_ref : (T, hd + H)  [g | a_src] for this tile's query rows.
    dsel_ref:(H, hd)      block-diagonal dst-attention selector.
    bias_ref:(T, N)       additive softmax mask (bf16, 0 / -1e30).
    out_ref :(T, hd)      per-head results written with ONE full-width store.
    """
    hd = n_heads * n_hidden
    # Key-side logits in row form: (H, N) = dsel (H, hd) x g^T via a
    # rhs-transposed contraction (no XLU transpose, nodes land in lanes).
    a_dst_t = lax.dot_general(
        dsel_ref[...].astype(jnp.float32),
        gk_ref[:, :hd].astype(jnp.float32),
        (((1,), (1,)), ((), ())),
        preferred_element_type=jnp.float32)

    outs = []
    for h in range(n_heads):
        a_src_h = gq_ref[:, hd + h:hd + h + 1].astype(jnp.float32)   # (T, 1)
        e = a_src_h + a_dst_t[h:h + 1, :]                            # (T, N)
        if 0.0 <= slope <= 1.0:
            e = jnp.maximum(e, slope * e)                            # LeakyReLU
        else:
            e = jnp.where(e >= 0.0, e, slope * e)
        e = e + bias_ref[...]                    # re-read bf16 mask per head
        m = jnp.max(e, axis=1, keepdims=True)
        p = jnp.exp(e - m)                       # un-normalized softmax
        s = jnp.sum(p, axis=1, keepdims=True)
        g_h = gk_ref[:, h * n_hidden:(h + 1) * n_hidden].astype(jnp.bfloat16)
        o = jnp.dot(p.astype(jnp.bfloat16), g_h,
                    preferred_element_type=jnp.float32)              # (T, D)
        o = o * pl.reciprocal(s, approx=True)    # deferred normalization (EUP)
        if apply_elu:
            # exp(o) - 1 (expm1 has no guaranteed Mosaic lowering; the
            # precision delta near 0 is far below the bf16 operand noise).
            o = jnp.where(o > 0.0, o, jnp.exp(o) - 1.0)
        outs.append(o)
    # Single full-width store (lane-concat once, no per-head masked stores).
    out_ref[...] = jnp.concatenate(outs, axis=-1).astype(out_ref.dtype)


# ---------------------------------------------------------------------------
# Fully fused path: both GAT layers in ONE pallas_call (grid-less, VMEM-resident).
# ---------------------------------------------------------------------------
def _fused_generator_kernel(x_ref, bias_ref, w1_ref, dsel1_ref, w2_ref,
                            dsel2_ref, out_ref, g1_scr, h1_scr, g2_scr, *,
                            n_heads, d1, d2, slope):
    # Layer 1 projection: one wide bf16 MXU matmul -> [g1 | a_src1] (f32 scratch).
    g1_scr[...] = jnp.dot(x_ref[...], w1_ref[...],
                          preferred_element_type=jnp.float32)
    # Layer-1 attention with fused ELU -> h1 (bf16 scratch, layer-2 operand).
    _attend(g1_scr, g1_scr, dsel1_ref, bias_ref, h1_scr,
            n_heads=n_heads, n_hidden=d1, slope=slope, apply_elu=True)
    # Layer 2.
    g2_scr[...] = jnp.dot(h1_scr[...], w2_ref[...],
                          preferred_element_type=jnp.float32)
    _attend(g2_scr, g2_scr, dsel2_ref, bias_ref, out_ref,
            n_heads=n_heads, n_hidden=d2, slope=slope, apply_elu=False)


def _fused_forward(x_bf, bias_bf, w1_aug, dsel1, w2_aug, dsel2, *,
                   n_heads, d1, d2, slope, vmem_limit):
    n_pad = x_bf.shape[0]
    hd1, hd2 = n_heads * d1, n_heads * d2
    kernel = functools.partial(_fused_generator_kernel, n_heads=n_heads,
                               d1=d1, d2=d2, slope=slope)
    return pl.pallas_call(
        kernel,
        out_shape=jax.ShapeDtypeStruct((n_pad, hd2), jnp.float32),
        scratch_shapes=[
            pltpu.VMEM((n_pad, hd1 + n_heads), jnp.float32),  # [g1 | a_src1]
            pltpu.VMEM((n_pad, hd1), jnp.bfloat16),           # h1
            pltpu.VMEM((n_pad, hd2 + n_heads), jnp.float32),  # [g2 | a_src2]
        ],
        compiler_params=pltpu.CompilerParams(vmem_limit_bytes=vmem_limit),
    )(x_bf, bias_bf, w1_aug, dsel1, w2_aug, dsel2)


# ---------------------------------------------------------------------------
# Tiled fallback for large graphs: per-layer projection + attention calls.
# ---------------------------------------------------------------------------
def _proj_kernel(h_ref, w_ref, g_ref):
    g_ref[...] = jnp.dot(h_ref[...], w_ref[...],
                         preferred_element_type=jnp.float32).astype(g_ref.dtype)


def _attn_kernel(gk_ref, gq_ref, dsel_ref, bias_ref, out_ref, *,
                 n_heads, n_hidden, slope, apply_elu):
    _attend(gk_ref, gq_ref, dsel_ref, bias_ref, out_ref,
            n_heads=n_heads, n_hidden=n_hidden, slope=slope,
            apply_elu=apply_elu)


def _gat_layer_tiled(h_bf, bias_bf, w_aug, dsel_t, *, n_heads, n_hidden, slope,
                     apply_elu, tile_m, out_dtype, vmem_limit):
    n_pad, f_in = h_bf.shape
    hd = n_heads * n_hidden
    hd_aug = hd + n_heads
    grid = (n_pad // tile_m,)
    cparams = pltpu.CompilerParams(dimension_semantics=("parallel",),
                                   vmem_limit_bytes=vmem_limit)

    # Projection: single wide bf16 matmul per row tile -> [g | a_src] (bf16
    # output halves the HBM round trip).  a_dst is re-derived from the resident
    # g inside the attention call, so there is no lane-narrow output at all.
    g_aug = pl.pallas_call(
        _proj_kernel,
        grid=grid,
        in_specs=[pl.BlockSpec((tile_m, f_in), lambda i: (i, 0)),
                  pl.BlockSpec((f_in, hd_aug), lambda i: (0, 0))],
        out_specs=pl.BlockSpec((tile_m, hd_aug), lambda i: (i, 0)),
        out_shape=jax.ShapeDtypeStruct((n_pad, hd_aug), jnp.bfloat16),
        compiler_params=cparams,
    )(h_bf, w_aug)

    kernel = functools.partial(_attn_kernel, n_heads=n_heads,
                               n_hidden=n_hidden, slope=slope,
                               apply_elu=apply_elu)
    return pl.pallas_call(
        kernel,
        grid=grid,
        in_specs=[
            pl.BlockSpec((n_pad, hd_aug), lambda i: (0, 0)),   # keys/values (resident)
            pl.BlockSpec((tile_m, hd_aug), lambda i: (i, 0)),  # query rows
            pl.BlockSpec((n_heads, hd), lambda i: (0, 0)),     # dst selector
            pl.BlockSpec((tile_m, n_pad), lambda i: (i, 0)),   # mask-bias row tile
        ],
        out_specs=pl.BlockSpec((tile_m, hd), lambda i: (i, 0)),
        out_shape=jax.ShapeDtypeStruct((n_pad, hd), out_dtype),
        compiler_params=cparams,
    )(g_aug, g_aug, dsel_t, bias_bf)


def _choose_tiled_config(n, hd_aug, vmem_limit):
    """Largest row tile whose attention-call working set fits the VMEM budget."""
    for tile_m in (512, 256, 128):
        n_pad = _round_up(n, tile_m)
        resident = n_pad * hd_aug * 2                       # bf16 [g | a_src]
        per_tile = (2 * tile_m * n_pad * 2                  # dbl-buffered bias tile
                    + 2 * tile_m * hd_aug * (2 + 4)         # query + out tiles
                    + 2 * tile_m * n_pad * 4)               # f32 logits (e, p)
        if resident + per_tile <= int(vmem_limit * 0.6):
            return tile_m, n_pad
    return 128, _round_up(n, 128)


# ---------------------------------------------------------------------------
# Wrapper.
# ---------------------------------------------------------------------------
def _augment_weights(w, attn_vec, n_heads):
    """W_aug = [W | W @ src_sel] (bf16) and the (H, hd) dst selector (f32)."""
    d = w.shape[1] // n_heads
    a_src, a_dst = attn_vec[:d], attn_vec[d:]
    eye = jnp.eye(n_heads, dtype=jnp.float32)
    src_sel = jnp.kron(eye, a_src[:, None])                 # (hd, H)
    dst_sel_t = jnp.kron(eye, a_dst[None, :])               # (H, hd)
    w_aug = jnp.concatenate([w, w @ src_sel], axis=1).astype(jnp.bfloat16)
    return w_aug, dst_sel_t.astype(jnp.float32)


def generator_forward(x, adj_mat, params, *, n_heads, leaky_relu_negative_slope):
    """x: (1, N, F_in), adj_mat: (1, N, N).  Returns (N, out_features) f32."""
    x2 = jnp.squeeze(x, 0).astype(jnp.float32)
    adj = jnp.squeeze(adj_mat, 0)
    n = x2.shape[0]
    slope = float(leaky_relu_negative_slope)

    w1, attn1 = params["w1"], params["attn1"]   # layer1.linear.weight.T, layer1.attn.weight[0]
    w2, attn2 = params["w2"], params["attn2"]   # output.linear.weight.T, output.attn.weight[0]
    d1 = w1.shape[1] // n_heads
    d2 = w2.shape[1] // n_heads

    w1_aug, dsel1 = _augment_weights(w1.astype(jnp.float32),
                                     attn1.astype(jnp.float32), n_heads)
    w2_aug, dsel2 = _augment_weights(w2.astype(jnp.float32),
                                     attn2.astype(jnp.float32), n_heads)

    # Additive softmax mask, computed once and shared by both layers; bf16
    # halves the only O(N^2) HBM stream.  -1e30 (finite) keeps padded rows NaN-free.
    bias = jnp.where(adj == 0, jnp.float32(_MASK_VALUE),
                     jnp.float32(0.0)).astype(jnp.bfloat16)

    vmem_limit = min(int(_vmem_capacity_bytes() * 0.75), 100 * 2 ** 20)

    n_pad = _round_up(max(n, 8), 8)
    fused_bytes = (2 * n_pad * n_pad * 4            # f32 logit workspace (e, p)
                   + n_pad * n_pad * 2              # bf16 mask
                   + n_pad * (d1 + d2) * n_heads * 12)
    if n_pad <= 1024 and fused_bytes <= vmem_limit // 2:
        # ---- fully fused path: both layers in ONE pallas_call ----
        if n_pad != n:
            x2 = jnp.pad(x2, ((0, n_pad - n), (0, 0)))
            bias = jnp.pad(bias, ((0, n_pad - n), (0, n_pad - n)),
                           constant_values=_MASK_VALUE)
        out = _fused_forward(x2.astype(jnp.bfloat16), bias, w1_aug, dsel1,
                             w2_aug, dsel2, n_heads=n_heads, d1=d1, d2=d2,
                             slope=slope, vmem_limit=vmem_limit)
        return out[:n]

    # ---- tiled fallback for large graphs ----
    hd_aug = n_heads * max(d1, d2) + n_heads
    tile_m, n_pad = _choose_tiled_config(n, hd_aug, vmem_limit)
    if n_pad != n:
        x2 = jnp.pad(x2, ((0, n_pad - n), (0, 0)))
        bias = jnp.pad(bias, ((0, n_pad - n), (0, n_pad - n)),
                       constant_values=_MASK_VALUE)
    h1 = _gat_layer_tiled(x2.astype(jnp.bfloat16), bias, w1_aug, dsel1,
                          n_heads=n_heads, n_hidden=d1, slope=slope,
                          apply_elu=True, tile_m=tile_m,
                          out_dtype=jnp.bfloat16, vmem_limit=vmem_limit)
    out = _gat_layer_tiled(h1, bias, w2_aug, dsel2,
                           n_heads=n_heads, n_hidden=d2, slope=slope,
                           apply_elu=False, tile_m=tile_m,
                           out_dtype=jnp.float32, vmem_limit=vmem_limit)
    return out[:n]


# ----------------------------------------------------------------------------
# Pure-JAX f32 reference (mirrors the PyTorch forward, eval-mode dropout).
# ----------------------------------------------------------------------------
def _gat_ref(h, w, attn_vec, adj, slope, n_heads):
    n = h.shape[0]
    d = w.shape[1] // n_heads
    g = (h @ w).reshape(n, n_heads, d)
    a1, a2 = attn_vec[:d], attn_vec[d:]
    a_src = jnp.einsum("nhd,d->nh", g, a1)
    a_dst = jnp.einsum("nhd,d->nh", g, a2)
    e = a_src[:, None, :] + a_dst[None, :, :]
    e = jnp.where(e >= 0.0, e, slope * e)
    e = jnp.where(adj[:, :, None] == 0.0, -jnp.inf, e)
    a = jax.nn.softmax(e, axis=1)
    res = jnp.einsum("ijh,jhf->ihf", a, g)
    return res.reshape(n, n_heads * d)


def generator_ref(x, adj_mat, params, *, n_heads, leaky_relu_negative_slope):
    x2 = jnp.squeeze(x, 0).astype(jnp.float32)
    adj = jnp.squeeze(adj_mat, 0).astype(jnp.float32)
    h1 = _gat_ref(x2, params["w1"], params["attn1"], adj,
                  leaky_relu_negative_slope, n_heads)
    h1 = jax.nn.elu(h1)
    return _gat_ref(h1, params["w2"], params["attn2"], adj,
                    leaky_relu_negative_slope, n_heads)


if __name__ == "__main__":
    # Small shapes consistent with the module.
    n_nodes = 8
    in_features = 32
    out_features = 32
    n_heads = 4
    slope = 0.2

    key = jax.random.PRNGKey(0)
    k_x, k_adj, k_w1, k_a1, k_w2, k_a2 = jax.random.split(key, 6)

    x = jax.random.normal(k_x, (1, n_nodes, in_features), dtype=jnp.float32)
    adj = (jax.random.uniform(k_adj, (1, n_nodes, n_nodes)) > 0.5).astype(jnp.float32)
    adj = jnp.maximum(adj, jnp.eye(n_nodes, dtype=jnp.float32)[None])  # self-loops

    d = out_features // n_heads
    params = {
        # layer1.linear.weight.T : (in_features, n_heads * d)
        "w1": 0.2 * jax.random.normal(k_w1, (in_features, out_features), jnp.float32),
        # layer1.attn.weight[0]  : (2 * d,)
        "attn1": 0.2 * jax.random.normal(k_a1, (2 * d,), jnp.float32),
        # output.linear.weight.T : (out_features, out_features)
        "w2": 0.2 * jax.random.normal(k_w2, (out_features, out_features), jnp.float32),
        # output.attn.weight[0]  : (2 * d,)
        "attn2": 0.2 * jax.random.normal(k_a2, (2 * d,), jnp.float32),
    }

    out = generator_forward(x, adj, params, n_heads=n_heads,
                            leaky_relu_negative_slope=slope)
    out = jax.block_until_ready(out)

    ref = generator_ref(x, adj, params, n_heads=n_heads,
                        leaky_relu_negative_slope=slope)
    assert out.shape == (n_nodes, out_features)
    # bf16 MXU operands (per review) bound the attainable accuracy vs the f32
    # reference; structural bugs would produce O(1) errors.
    max_err = float(jnp.max(jnp.abs(out - ref)))
    assert jnp.allclose(out, ref, atol=5e-2, rtol=5e-2), (
        f"mismatch vs reference: max abs diff = {max_err}")

    print("KERNEL_OK")
</pallas_src>

<mosaic_0001>
module attributes {stable_mosaic.version = 11 : i64} {
  func.func @_fused_generator_kernel(%arg0: memref<8x32xbf16, #tpu.memory_space<vmem>>, %arg1: memref<8x8xbf16, #tpu.memory_space<vmem>>, %arg2: memref<32x36xbf16, #tpu.memory_space<vmem>>, %arg3: memref<4x32xf32, #tpu.memory_space<vmem>>, %arg4: memref<32x36xbf16, #tpu.memory_space<vmem>>, %arg5: memref<4x32xf32, #tpu.memory_space<vmem>>, %arg6: memref<8x32xf32, #tpu.memory_space<vmem>>, %arg7: memref<8x36xf32, #tpu.memory_space<vmem>>, %arg8: memref<8x32xbf16, #tpu.memory_space<vmem>>, %arg9: memref<8x36xf32, #tpu.memory_space<vmem>>) attributes {dimension_semantics = [], scalar_prefetch = 0 : i64, scratch_operands = 3 : i64, tpu.core_type = #tpu.core_type<tc>} {
    %c0 = arith.constant 0 : index
    %c0_0 = arith.constant 0 : index
    %0 = vector.load %arg0[%c0, %c0_0] : memref<8x32xbf16, #tpu.memory_space<vmem>>, vector<8x32xbf16>
    %c0_1 = arith.constant 0 : index
    %c0_2 = arith.constant 0 : index
    %1 = vector.load %arg2[%c0_1, %c0_2] : memref<32x36xbf16, #tpu.memory_space<vmem>>, vector<32x36xbf16>
    %cst = arith.constant dense<0.000000e+00> : vector<8x36xf32>
    %2 = tpu.matmul %0, %1, %cst {dimension_numbers = #tpu.dot_dimension_numbers<[1], [0], [0], [1], [0, 0, 1, 1], [], []>} : vector<8x32xbf16>, vector<32x36xbf16>, vector<8x36xf32> -> vector<8x36xf32>
    %c0_3 = arith.constant 0 : index
    %c0_4 = arith.constant 0 : index
    %3 = vector.load %arg7[%c0_3, %c0_4] : memref<8x36xf32, #tpu.memory_space<vmem>>, vector<8x36xf32>
    tpu.vector_store %arg7[%c0_3, %c0_4], %2 {strides = array<i32>} : memref<8x36xf32, #tpu.memory_space<vmem>>, vector<8x36xf32>,
    %c0_5 = arith.constant 0 : index
    %c0_6 = arith.constant 0 : index
    %4 = vector.load %arg3[%c0_5, %c0_6] : memref<4x32xf32, #tpu.memory_space<vmem>>, vector<4x32xf32>
    %c0_7 = arith.constant 0 : index
    %c0_8 = arith.constant 0 : index
    %5 = vector.load %arg7[%c0_7, %c0_8] : memref<8x36xf32, #tpu.memory_space<vmem>>, vector<8x32xf32>
    %cst_9 = arith.constant dense<0.000000e+00> : vector<4x8xf32>
    %6 = tpu.matmul %4, %5, %cst_9 {dimension_numbers = #tpu.dot_dimension_numbers<[1], [1], [0], [0], [0, 0, 1, 0], [], []>} : vector<4x32xf32>, vector<8x32xf32>, vector<4x8xf32> -> vector<4x8xf32>
    %c0_10 = arith.constant 0 : index
    %c32 = arith.constant 32 : index
    %7 = vector.load %arg7[%c0_10, %c32] : memref<8x36xf32, #tpu.memory_space<vmem>>, vector<8x1xf32>
    %8 = vector.extract_strided_slice %6 {offsets = [0, 0], sizes = [1, 8], strides = [1, 1]} : vector<4x8xf32> to vector<1x8xf32>
    %9 = vector.broadcast %7 : vector<8x1xf32> to vector<8x8xf32>
    %10 = vector.broadcast %8 : vector<1x8xf32> to vector<8x8xf32>
    %11 = arith.addf %9, %10 : vector<8x8xf32>
    %cst_11 = arith.constant 2.000000e-01 : f32
    %12 = vector.broadcast %cst_11 : f32 to vector<8x8xf32>
    %13 = arith.mulf %12, %11 : vector<8x8xf32>
    %14 = arith.maximumf %11, %13 : vector<8x8xf32>
    %c0_12 = arith.constant 0 : index
    %c0_13 = arith.constant 0 : index
    %15 = vector.load %arg1[%c0_12, %c0_13] : memref<8x8xbf16, #tpu.memory_space<vmem>>, vector<8x8xbf16>
    %16 = arith.extf %15 : vector<8x8xbf16> to vector<8x8xf32>
    %17 = arith.addf %14, %16 : vector<8x8xf32>
    %cst_14 = arith.constant dense<0xFF800000> : vector<8xf32>
    %18 = vector.multi_reduction <maximumf>, %17, %cst_14 [1] : vector<8x8xf32> to vector<8xf32>
    %19 = vector.shape_cast %18 : vector<8xf32> to vector<8x1xf32>
    %20 = vector.broadcast %19 : vector<8x1xf32> to vector<8x8xf32>
    %21 = arith.subf %17, %20 : vector<8x8xf32>
    %22 = math.exp %21 : vector<8x8xf32>
    %cst_15 = arith.constant dense<0.000000e+00> : vector<8xf32>
    %23 = vector.multi_reduction <add>, %22, %cst_15 [1] : vector<8x8xf32> to vector<8xf32>
    %24 = vector.shape_cast %23 : vector<8xf32> to vector<8x1xf32>
    %c0_16 = arith.constant 0 : index
    %c0_17 = arith.constant 0 : index
    %25 = vector.load %arg7[%c0_16, %c0_17] : memref<8x36xf32, #tpu.memory_space<vmem>>, vector<8x8xf32>
    %26 = arith.truncf %25 : vector<8x8xf32> to vector<8x8xbf16>
    %27 = arith.truncf %22 : vector<8x8xf32> to vector<8x8xbf16>
    %cst_18 = arith.constant dense<0.000000e+00> : vector<8x8xf32>
    %28 = tpu.matmul %27, %26, %cst_18 {dimension_numbers = #tpu.dot_dimension_numbers<[1], [0], [0], [1], [0, 0, 1, 1], [], []>} : vector<8x8xbf16>, vector<8x8xbf16>, vector<8x8xf32> -> vector<8x8xf32>
    %29 = tpu.reciprocal %24 {approx = true} : vector<8x1xf32> -> vector<8x1xf32>
    %30 = vector.broadcast %29 : vector<8x1xf32> to vector<8x8xf32>
    %31 = arith.mulf %28, %30 : vector<8x8xf32>
    %cst_19 = arith.constant 0.000000e+00 : f32
    %32 = vector.broadcast %cst_19 : f32 to vector<8x8xf32>
    %33 = arith.cmpf ogt, %31, %32 : vector<8x8xf32>
    %34 = math.exp %31 : vector<8x8xf32>
    %cst_20 = arith.constant 1.000000e+00 : f32
    %35 = vector.broadcast %cst_20 : f32 to vector<8x8xf32>
    %36 = arith.subf %34, %35 : vector<8x8xf32>
    %37 = arith.select %33, %31, %36 : vector<8x8xi1>, vector<8x8xf32>
    %c0_21 = arith.constant 0 : index
    %c33 = arith.constant 33 : index
    %38 = vector.load %arg7[%c0_21, %c33] : memref<8x36xf32, #tpu.memory_space<vmem>>, vector<8x1xf32>
    %39 = vector.extract_strided_slice %6 {offsets = [1, 0], sizes = [1, 8], strides = [1, 1]} : vector<4x8xf32> to vector<1x8xf32>
    %40 = vector.broadcast %38 : vector<8x1xf32> to vector<8x8xf32>
    %41 = vector.broadcast %39 : vector<1x8xf32> to vector<8x8xf32>
    %42 = arith.addf %40, %41 : vector<8x8xf32>
    %cst_22 = arith.constant 2.000000e-01 : f32
    %43 = vector.broadcast %cst_22 : f32 to vector<8x8xf32>
    %44 = arith.mulf %43, %42 : vector<8x8xf32>
    %45 = arith.maximumf %42, %44 : vector<8x8xf32>
    %c0_23 = arith.constant 0 : index
    %c0_24 = arith.constant 0 : index
    %46 = vector.load %arg1[%c0_23, %c0_24] : memref<8x8xbf16, #tpu.memory_space<vmem>>, vector<8x8xbf16>
    %47 = arith.extf %46 : vector<8x8xbf16> to vector<8x8xf32>
    %48 = arith.addf %45, %47 : vector<8x8xf32>
    %cst_25 = arith.constant dense<0xFF800000> : vector<8xf32>
    %49 = vector.multi_reduction <maximumf>, %48, %cst_25 [1] : vector<8x8xf32> to vector<8xf32>
    %50 = vector.shape_cast %49 : vector<8xf32> to vector<8x1xf32>
    %51 = vector.broadcast %50 : vector<8x1xf32> to vector<8x8xf32>
    %52 = arith.subf %48, %51 : vector<8x8xf32>
    %53 = math.exp %52 : vector<8x8xf32>
    %cst_26 = arith.constant dense<0.000000e+00> : vector<8xf32>
    %54 = vector.multi_reduction <add>, %53, %cst_26 [1] : vector<8x8xf32> to vector<8xf32>
    %55 = vector.shape_cast %54 : vector<8xf32> to vector<8x1xf32>
    %c0_27 = arith.constant 0 : index
    %c8 = arith.constant 8 : index
    %56 = vector.load %arg7[%c0_27, %c8] : memref<8x36xf32, #tpu.memory_space<vmem>>, vector<8x8xf32>
    %57 = arith.truncf %56 : vector<8x8xf32> to vector<8x8xbf16>
    %58 = arith.truncf %53 : vector<8x8xf32> to vector<8x8xbf16>
    %cst_28 = arith.constant dense<0.000000e+00> : vector<8x8xf32>
    %59 = tpu.matmul %58, %57, %cst_28 {dimension_numbers = #tpu.dot_dimension_numbers<[1], [0], [0], [1], [0, 0, 1, 1], [], []>} : vector<8x8xbf16>, vector<8x8xbf16>, vector<8x8xf32> -> vector<8x8xf32>
    %60 = tpu.reciprocal %55 {approx = true} : vector<8x1xf32> -> vector<8x1xf32>
    %61 = vector.broadcast %60 : vector<8x1xf32> to vector<8x8xf32>
    %62 = arith.mulf %59, %61 : vector<8x8xf32>
    %cst_29 = arith.constant 0.000000e+00 : f32
    %63 = vector.broadcast %cst_29 : f32 to vector<8x8xf32>
    %64 = arith.cmpf ogt, %62, %63 : vector<8x8xf32>
    %65 = math.exp %62 : vector<8x8xf32>
    %cst_30 = arith.constant 1.000000e+00 : f32
    %66 = vector.broadcast %cst_30 : f32 to vector<8x8xf32>
    %67 = arith.subf %65, %66 : vector<8x8xf32>
    %68 = arith.select %64, %62, %67 : vector<8x8xi1>, vector<8x8xf32>
    %c0_31 = arith.constant 0 : index
    %c34 = arith.constant 34 : index
    %69 = vector.load %arg7[%c0_31, %c34] : memref<8x36xf32, #tpu.memory_space<vmem>>, vector<8x1xf32>
    %70 = vector.extract_strided_slice %6 {offsets = [2, 0], sizes = [1, 8], strides = [1, 1]} : vector<4x8xf32> to vector<1x8xf32>
    %71 = vector.broadcast %69 : vector<8x1xf32> to vector<8x8xf32>
    %72 = vector.broadcast %70 : vector<1x8xf32> to vector<8x8xf32>
    %73 = arith.addf %71, %72 : vector<8x8xf32>
    %cst_32 = arith.constant 2.000000e-01 : f32
    %74 = vector.broadcast %cst_32 : f32 to vector<8x8xf32>
    %75 = arith.mulf %74, %73 : vector<8x8xf32>
    %76 = arith.maximumf %73, %75 : vector<8x8xf32>
    %c0_33 = arith.constant 0 : index
    %c0_34 = arith.constant 0 : index
    %77 = vector.load %arg1[%c0_33, %c0_34] : memref<8x8xbf16, #tpu.memory_space<vmem>>, vector<8x8xbf16>
    %78 = arith.extf %77 : vector<8x8xbf16> to vector<8x8xf32>
    %79 = arith.addf %76, %78 : vector<8x8xf32>
    %cst_35 = arith.constant dense<0xFF800000> : vector<8xf32>
    %80 = vector.multi_reduction <maximumf>, %79, %cst_35 [1] : vector<8x8xf32> to vector<8xf32>
    %81 = vector.shape_cast %80 : vector<8xf32> to vector<8x1xf32>
    %82 = vector.broadcast %81 : vector<8x1xf32> to vector<8x8xf32>
    %83 = arith.subf %79, %82 : vector<8x8xf32>
    %84 = math.exp %83 : vector<8x8xf32>
    %cst_36 = arith.constant dense<0.000000e+00> : vector<8xf32>
    %85 = vector.multi_reduction <add>, %84, %cst_36 [1] : vector<8x8xf32> to vector<8xf32>
    %86 = vector.shape_cast %85 : vector<8xf32> to vector<8x1xf32>
    %c0_37 = arith.constant 0 : index
    %c16 = arith.constant 16 : index
    %87 = vector.load %arg7[%c0_37, %c16] : memref<8x36xf32, #tpu.memory_space<vmem>>, vector<8x8xf32>
    %88 = arith.truncf %87 : vector<8x8xf32> to vector<8x8xbf16>
    %89 = arith.truncf %84 : vector<8x8xf32> to vector<8x8xbf16>
    %cst_38 = arith.constant dense<0.000000e+00> : vector<8x8xf32>
    %90 = tpu.matmul %89, %88, %cst_38 {dimension_numbers = #tpu.dot_dimension_numbers<[1], [0], [0], [1], [0, 0, 1, 1], [], []>} : vector<8x8xbf16>, vector<8x8xbf16>, vector<8x8xf32> -> vector<8x8xf32>
    %91 = tpu.reciprocal %86 {approx = true} : vector<8x1xf32> -> vector<8x1xf32>
    %92 = vector.broadcast %91 : vector<8x1xf32> to vector<8x8xf32>
    %93 = arith.mulf %90, %92 : vector<8x8xf32>
    %cst_39 = arith.constant 0.000000e+00 : f32
    %94 = vector.broadcast %cst_39 : f32 to vector<8x8xf32>
    %95 = arith.cmpf ogt, %93, %94 : vector<8x8xf32>
    %96 = math.exp %93 : vector<8x8xf32>
    %cst_40 = arith.constant 1.000000e+00 : f32
    %97 = vector.broadcast %cst_40 : f32 to vector<8x8xf32>
    %98 = arith.subf %96, %97 : vector<8x8xf32>
    %99 = arith.select %95, %93, %98 : vector<8x8xi1>, vector<8x8xf32>
    %c0_41 = arith.constant 0 : index
    %c35 = arith.constant 35 : index
    %100 = vector.load %arg7[%c0_41, %c35] : memref<8x36xf32, #tpu.memory_space<vmem>>, vector<8x1xf32>
    %101 = vector.extract_strided_slice %6 {offsets = [3, 0], sizes = [1, 8], strides = [1, 1]} : vector<4x8xf32> to vector<1x8xf32>
    %102 = vector.broadcast %100 : vector<8x1xf32> to vector<8x8xf32>
    %103 = vector.broadcast %101 : vector<1x8xf32> to vector<8x8xf32>
    %104 = arith.addf %102, %103 : vector<8x8xf32>
    %cst_42 = arith.constant 2.000000e-01 : f32
    %105 = vector.broadcast %cst_42 : f32 to vector<8x8xf32>
    %106 = arith.mulf %105, %104 : vector<8x8xf32>
    %107 = arith.maximumf %104, %106 : vector<8x8xf32>
    %c0_43 = arith.constant 0 : index
    %c0_44 = arith.constant 0 : index
    %108 = vector.load %arg1[%c0_43, %c0_44] : memref<8x8xbf16, #tpu.memory_space<vmem>>, vector<8x8xbf16>
    %109 = arith.extf %108 : vector<8x8xbf16> to vector<8x8xf32>
    %110 = arith.addf %107, %109 : vector<8x8xf32>
    %cst_45 = arith.constant dense<0xFF800000> : vector<8xf32>
    %111 = vector.multi_reduction <maximumf>, %110, %cst_45 [1] : vector<8x8xf32> to vector<8xf32>
    %112 = vector.shape_cast %111 : vector<8xf32> to vector<8x1xf32>
    %113 = vector.broadcast %112 : vector<8x1xf32> to vector<8x8xf32>
    %114 = arith.subf %110, %113 : vector<8x8xf32>
    %115 = math.exp %114 : vector<8x8xf32>
    %cst_46 = arith.constant dense<0.000000e+00> : vector<8xf32>
    %116 = vector.multi_reduction <add>, %115, %cst_46 [1] : vector<8x8xf32> to vector<8xf32>
    %117 = vector.shape_cast %116 : vector<8xf32> to vector<8x1xf32>
    %c0_47 = arith.constant 0 : index
    %c24 = arith.constant 24 : index
    %118 = vector.load %arg7[%c0_47, %c24] : memref<8x36xf32, #tpu.memory_space<vmem>>, vector<8x8xf32>
    %119 = arith.truncf %118 : vector<8x8xf32> to vector<8x8xbf16>
    %120 = arith.truncf %115 : vector<8x8xf32> to vector<8x8xbf16>
    %cst_48 = arith.constant dense<0.000000e+00> : vector<8x8xf32>
    %121 = tpu.matmul %120, %119, %cst_48 {dimension_numbers = #tpu.dot_dimension_numbers<[1], [0], [0], [1], [0, 0, 1, 1], [], []>} : vector<8x8xbf16>, vector<8x8xbf16>, vector<8x8xf32> -> vector<8x8xf32>
    %122 = tpu.reciprocal %117 {approx = true} : vector<8x1xf32> -> vector<8x1xf32>
    %123 = vector.broadcast %122 : vector<8x1xf32> to vector<8x8xf32>
    %124 = arith.mulf %121, %123 : vector<8x8xf32>
    %cst_49 = arith.constant 0.000000e+00 : f32
    %125 = vector.broadcast %cst_49 : f32 to vector<8x8xf32>
    %126 = arith.cmpf ogt, %124, %125 : vector<8x8xf32>
    %127 = math.exp %124 : vector<8x8xf32>
    %cst_50 = arith.constant 1.000000e+00 : f32
    %128 = vector.broadcast %cst_50 : f32 to vector<8x8xf32>
    %129 = arith.subf %127, %128 : vector<8x8xf32>
    %130 = arith.select %126, %124, %129 : vector<8x8xi1>, vector<8x8xf32>
    %131 = tpu.concatenate %37, %68, %99, %130 in 1 : vector<8x8xf32>, vector<8x8xf32>, vector<8x8xf32>, vector<8x8xf32> -> vector<8x32xf32>
    %132 = arith.truncf %131 : vector<8x32xf32> to vector<8x32xbf16>
    %c0_51 = arith.constant 0 : index
    %c0_52 = arith.constant 0 : index
    %133 = vector.load %arg8[%c0_51, %c0_52] : memref<8x32xbf16, #tpu.memory_space<vmem>>, vector<8x32xbf16>
    tpu.vector_store %arg8[%c0_51, %c0_52], %132 {strides = array<i32>} : memref<8x32xbf16, #tpu.memory_space<vmem>>, vector<8x32xbf16>,
    %c0_53 = arith.constant 0 : index
    %c0_54 = arith.constant 0 : index
    %134 = vector.load %arg8[%c0_53, %c0_54] : memref<8x32xbf16, #tpu.memory_space<vmem>>, vector<8x32xbf16>
    %c0_55 = arith.constant 0 : index
    %c0_56 = arith.constant 0 : index
    %135 = vector.load %arg4[%c0_55, %c0_56] : memref<32x36xbf16, #tpu.memory_space<vmem>>, vector<32x36xbf16>
    %cst_57 = arith.constant dense<0.000000e+00> : vector<8x36xf32>
    %136 = tpu.matmul %134, %135, %cst_57 {dimension_numbers = #tpu.dot_dimension_numbers<[1], [0], [0], [1], [0, 0, 1, 1], [], []>} : vector<8x32xbf16>, vector<32x36xbf16>, vector<8x36xf32> -> vector<8x36xf32>
    %c0_58 = arith.constant 0 : index
    %c0_59 = arith.constant 0 : index
    %137 = vector.load %arg9[%c0_58, %c0_59] : memref<8x36xf32, #tpu.memory_space<vmem>>, vector<8x36xf32>
    tpu.vector_store %arg9[%c0_58, %c0_59], %136 {strides = array<i32>} : memref<8x36xf32, #tpu.memory_space<vmem>>, vector<8x36xf32>,
    %c0_60 = arith.constant 0 : index
    %c0_61 = arith.constant 0 : index
    %138 = vector.load %arg5[%c0_60, %c0_61] : memref<4x32xf32, #tpu.memory_space<vmem>>, vector<4x32xf32>
    %c0_62 = arith.constant 0 : index
    %c0_63 = arith.constant 0 : index
    %139 = vector.load %arg9[%c0_62, %c0_63] : memref<8x36xf32, #tpu.memory_space<vmem>>, vector<8x32xf32>
    %cst_64 = arith.constant dense<0.000000e+00> : vector<4x8xf32>
    %140 = tpu.matmul %138, %139, %cst_64 {dimension_numbers = #tpu.dot_dimension_numbers<[1], [1], [0], [0], [0, 0, 1, 0], [], []>} : vector<4x32xf32>, vector<8x32xf32>, vector<4x8xf32> -> vector<4x8xf32>
    %c0_65 = arith.constant 0 : index
    %c32_66 = arith.constant 32 : index
    %141 = vector.load %arg9[%c0_65, %c32_66] : memref<8x36xf32, #tpu.memory_space<vmem>>, vector<8x1xf32>
    %142 = vector.extract_strided_slice %140 {offsets = [0, 0], sizes = [1, 8], strides = [1, 1]} : vector<4x8xf32> to vector<1x8xf32>
    %143 = vector.broadcast %141 : vector<8x1xf32> to vector<8x8xf32>
    %144 = vector.broadcast %142 : vector<1x8xf32> to vector<8x8xf32>
    %145 = arith.addf %143, %144 : vector<8x8xf32>
    %cst_67 = arith.constant 2.000000e-01 : f32
    %146 = vector.broadcast %cst_67 : f32 to vector<8x8xf32>
    %147 = arith.mulf %146, %145 : vector<8x8xf32>
    %148 = arith.maximumf %145, %147 : vector<8x8xf32>
    %c0_68 = arith.constant 0 : index
    %c0_69 = arith.constant 0 : index
    %149 = vector.load %arg1[%c0_68, %c0_69] : memref<8x8xbf16, #tpu.memory_space<vmem>>, vector<8x8xbf16>
    %150 = arith.extf %149 : vector<8x8xbf16> to vector<8x8xf32>
    %151 = arith.addf %148, %150 : vector<8x8xf32>
    %cst_70 = arith.constant dense<0xFF800000> : vector<8xf32>
    %152 = vector.multi_reduction <maximumf>, %151, %cst_70 [1] : vector<8x8xf32> to vector<8xf32>
    %153 = vector.shape_cast %152 : vector<8xf32> to vector<8x1xf32>
    %154 = vector.broadcast %153 : vector<8x1xf32> to vector<8x8xf32>
    %155 = arith.subf %151, %154 : vector<8x8xf32>
    %156 = math.exp %155 : vector<8x8xf32>
    %cst_71 = arith.constant dense<0.000000e+00> : vector<8xf32>
    %157 = vector.multi_reduction <add>, %156, %cst_71 [1] : vector<8x8xf32> to vector<8xf32>
    %158 = vector.shape_cast %157 : vector<8xf32> to vector<8x1xf32>
    %c0_72 = arith.constant 0 : index
    %c0_73 = arith.constant 0 : index
    %159 = vector.load %arg9[%c0_72, %c0_73] : memref<8x36xf32, #tpu.memory_space<vmem>>, vector<8x8xf32>
    %160 = arith.truncf %159 : vector<8x8xf32> to vector<8x8xbf16>
    %161 = arith.truncf %156 : vector<8x8xf32> to vector<8x8xbf16>
    %cst_74 = arith.constant dense<0.000000e+00> : vector<8x8xf32>
    %162 = tpu.matmul %161, %160, %cst_74 {dimension_numbers = #tpu.dot_dimension_numbers<[1], [0], [0], [1], [0, 0, 1, 1], [], []>} : vector<8x8xbf16>, vector<8x8xbf16>, vector<8x8xf32> -> vector<8x8xf32>
    %163 = tpu.reciprocal %158 {approx = true} : vector<8x1xf32> -> vector<8x1xf32>
    %164 = vector.broadcast %163 : vector<8x1xf32> to vector<8x8xf32>
    %165 = arith.mulf %162, %164 : vector<8x8xf32>
    %c0_75 = arith.constant 0 : index
    %c33_76 = arith.constant 33 : index
    %166 = vector.load %arg9[%c0_75, %c33_76] : memref<8x36xf32, #tpu.memory_space<vmem>>, vector<8x1xf32>
    %167 = vector.extract_strided_slice %140 {offsets = [1, 0], sizes = [1, 8], strides = [1, 1]} : vector<4x8xf32> to vector<1x8xf32>
    %168 = vector.broadcast %166 : vector<8x1xf32> to vector<8x8xf32>
    %169 = vector.broadcast %167 : vector<1x8xf32> to vector<8x8xf32>
    %170 = arith.addf %168, %169 : vector<8x8xf32>
    %cst_77 = arith.constant 2.000000e-01 : f32
    %171 = vector.broadcast %cst_77 : f32 to vector<8x8xf32>
    %172 = arith.mulf %171, %170 : vector<8x8xf32>
    %173 = arith.maximumf %170, %172 : vector<8x8xf32>
    %c0_78 = arith.constant 0 : index
    %c0_79 = arith.constant 0 : index
    %174 = vector.load %arg1[%c0_78, %c0_79] : memref<8x8xbf16, #tpu.memory_space<vmem>>, vector<8x8xbf16>
    %175 = arith.extf %174 : vector<8x8xbf16> to vector<8x8xf32>
    %176 = arith.addf %173, %175 : vector<8x8xf32>
    %cst_80 = arith.constant dense<0xFF800000> : vector<8xf32>
    %177 = vector.multi_reduction <maximumf>, %176, %cst_80 [1] : vector<8x8xf32> to vector<8xf32>
    %178 = vector.shape_cast %177 : vector<8xf32> to vector<8x1xf32>
    %179 = vector.broadcast %178 : vector<8x1xf32> to vector<8x8xf32>
    %180 = arith.subf %176, %179 : vector<8x8xf32>
    %181 = math.exp %180 : vector<8x8xf32>
    %cst_81 = arith.constant dense<0.000000e+00> : vector<8xf32>
    %182 = vector.multi_reduction <add>, %181, %cst_81 [1] : vector<8x8xf32> to vector<8xf32>
    %183 = vector.shape_cast %182 : vector<8xf32> to vector<8x1xf32>
    %c0_82 = arith.constant 0 : index
    %c8_83 = arith.constant 8 : index
    %184 = vector.load %arg9[%c0_82, %c8_83] : memref<8x36xf32, #tpu.memory_space<vmem>>, vector<8x8xf32>
    %185 = arith.truncf %184 : vector<8x8xf32> to vector<8x8xbf16>
    %186 = arith.truncf %181 : vector<8x8xf32> to vector<8x8xbf16>
    %cst_84 = arith.constant dense<0.000000e+00> : vector<8x8xf32>
    %187 = tpu.matmul %186, %185, %cst_84 {dimension_numbers = #tpu.dot_dimension_numbers<[1], [0], [0], [1], [0, 0, 1, 1], [], []>} : vector<8x8xbf16>, vector<8x8xbf16>, vector<8x8xf32> -> vector<8x8xf32>
    %188 = tpu.reciprocal %183 {approx = true} : vector<8x1xf32> -> vector<8x1xf32>
    %189 = vector.broadcast %188 : vector<8x1xf32> to vector<8x8xf32>
    %190 = arith.mulf %187, %189 : vector<8x8xf32>
    %c0_85 = arith.constant 0 : index
    %c34_86 = arith.constant 34 : index
    %191 = vector.load %arg9[%c0_85, %c34_86] : memref<8x36xf32, #tpu.memory_space<vmem>>, vector<8x1xf32>
    %192 = vector.extract_strided_slice %140 {offsets = [2, 0], sizes = [1, 8], strides = [1, 1]} : vector<4x8xf32> to vector<1x8xf32>
    %193 = vector.broadcast %191 : vector<8x1xf32> to vector<8x8xf32>
    %194 = vector.broadcast %192 : vector<1x8xf32> to vector<8x8xf32>
    %195 = arith.addf %193, %194 : vector<8x8xf32>
    %cst_87 = arith.constant 2.000000e-01 : f32
    %196 = vector.broadcast %cst_87 : f32 to vector<8x8xf32>
    %197 = arith.mulf %196, %195 : vector<8x8xf32>
    %198 = arith.maximumf %195, %197 : vector<8x8xf32>
    %c0_88 = arith.constant 0 : index
    %c0_89 = arith.constant 0 : index
    %199 = vector.load %arg1[%c0_88, %c0_89] : memref<8x8xbf16, #tpu.memory_space<vmem>>, vector<8x8xbf16>
    %200 = arith.extf %199 : vector<8x8xbf16> to vector<8x8xf32>
    %201 = arith.addf %198, %200 : vector<8x8xf32>
    %cst_90 = arith.constant dense<0xFF800000> : vector<8xf32>
    %202 = vector.multi_reduction <maximumf>, %201, %cst_90 [1] : vector<8x8xf32> to vector<8xf32>
    %203 = vector.shape_cast %202 : vector<8xf32> to vector<8x1xf32>
    %204 = vector.broadcast %203 : vector<8x1xf32> to vector<8x8xf32>
    %205 = arith.subf %201, %204 : vector<8x8xf32>
    %206 = math.exp %205 : vector<8x8xf32>
    %cst_91 = arith.constant dense<0.000000e+00> : vector<8xf32>
    %207 = vector.multi_reduction <add>, %206, %cst_91 [1] : vector<8x8xf32> to vector<8xf32>
    %208 = vector.shape_cast %207 : vector<8xf32> to vector<8x1xf32>
    %c0_92 = arith.constant 0 : index
    %c16_93 = arith.constant 16 : index
    %209 = vector.load %arg9[%c0_92, %c16_93] : memref<8x36xf32, #tpu.memory_space<vmem>>, vector<8x8xf32>
    %210 = arith.truncf %209 : vector<8x8xf32> to vector<8x8xbf16>
    %211 = arith.truncf %206 : vector<8x8xf32> to vector<8x8xbf16>
    %cst_94 = arith.constant dense<0.000000e+00> : vector<8x8xf32>
    %212 = tpu.matmul %211, %210, %cst_94 {dimension_numbers = #tpu.dot_dimension_numbers<[1], [0], [0], [1], [0, 0, 1, 1], [], []>} : vector<8x8xbf16>, vector<8x8xbf16>, vector<8x8xf32> -> vector<8x8xf32>
    %213 = tpu.reciprocal %208 {approx = true} : vector<8x1xf32> -> vector<8x1xf32>
    %214 = vector.broadcast %213 : vector<8x1xf32> to vector<8x8xf32>
    %215 = arith.mulf %212, %214 : vector<8x8xf32>
    %c0_95 = arith.constant 0 : index
    %c35_96 = arith.constant 35 : index
    %216 = vector.load %arg9[%c0_95, %c35_96] : memref<8x36xf32, #tpu.memory_space<vmem>>, vector<8x1xf32>
    %217 = vector.extract_strided_slice %140 {offsets = [3, 0], sizes = [1, 8], strides = [1, 1]} : vector<4x8xf32> to vector<1x8xf32>
    %218 = vector.broadcast %216 : vector<8x1xf32> to vector<8x8xf32>
    %219 = vector.broadcast %217 : vector<1x8xf32> to vector<8x8xf32>
    %220 = arith.addf %218, %219 : vector<8x8xf32>
    %cst_97 = arith.constant 2.000000e-01 : f32
    %221 = vector.broadcast %cst_97 : f32 to vector<8x8xf32>
    %222 = arith.mulf %221, %220 : vector<8x8xf32>
    %223 = arith.maximumf %220, %222 : vector<8x8xf32>
    %c0_98 = arith.constant 0 : index
    %c0_99 = arith.constant 0 : index
    %224 = vector.load %arg1[%c0_98, %c0_99] : memref<8x8xbf16, #tpu.memory_space<vmem>>, vector<8x8xbf16>
    %225 = arith.extf %224 : vector<8x8xbf16> to vector<8x8xf32>
    %226 = arith.addf %223, %225 : vector<8x8xf32>
    %cst_100 = arith.constant dense<0xFF800000> : vector<8xf32>
    %227 = vector.multi_reduction <maximumf>, %226, %cst_100 [1] : vector<8x8xf32> to vector<8xf32>
    %228 = vector.shape_cast %227 : vector<8xf32> to vector<8x1xf32>
    %229 = vector.broadcast %228 : vector<8x1xf32> to vector<8x8xf32>
    %230 = arith.subf %226, %229 : vector<8x8xf32>
    %231 = math.exp %230 : vector<8x8xf32>
    %cst_101 = arith.constant dense<0.000000e+00> : vector<8xf32>
    %232 = vector.multi_reduction <add>, %231, %cst_101 [1] : vector<8x8xf32> to vector<8xf32>
    %233 = vector.shape_cast %232 : vector<8xf32> to vector<8x1xf32>
    %c0_102 = arith.constant 0 : index
    %c24_103 = arith.constant 24 : index
    %234 = vector.load %arg9[%c0_102, %c24_103] : memref<8x36xf32, #tpu.memory_space<vmem>>, vector<8x8xf32>
    %235 = arith.truncf %234 : vector<8x8xf32> to vector<8x8xbf16>
    %236 = arith.truncf %231 : vector<8x8xf32> to vector<8x8xbf16>
    %cst_104 = arith.constant dense<0.000000e+00> : vector<8x8xf32>
    %237 = tpu.matmul %236, %235, %cst_104 {dimension_numbers = #tpu.dot_dimension_numbers<[1], [0], [0], [1], [0, 0, 1, 1], [], []>} : vector<8x8xbf16>, vector<8x8xbf16>, vector<8x8xf32> -> vector<8x8xf32>
    %238 = tpu.reciprocal %233 {approx = true} : vector<8x1xf32> -> vector<8x1xf32>
    %239 = vector.broadcast %238 : vector<8x1xf32> to vector<8x8xf32>
    %240 = arith.mulf %237, %239 : vector<8x8xf32>
    %241 = tpu.concatenate %165, %190, %215, %240 in 1 : vector<8x8xf32>, vector<8x8xf32>, vector<8x8xf32>, vector<8x8xf32> -> vector<8x32xf32>
    %c0_105 = arith.constant 0 : index
    %c0_106 = arith.constant 0 : index
    %242 = vector.load %arg6[%c0_105, %c0_106] : memref<8x32xf32, #tpu.memory_space<vmem>>, vector<8x32xf32>
    tpu.vector_store %arg6[%c0_105, %c0_106], %241 {strides = array<i32>} : memref<8x32xf32, #tpu.memory_space<vmem>>, vector<8x32xf32>,
    return
  }
}

</mosaic_0001>

<llo_original>
// kernel: tpu_custom_call.1
$region0: #{tpu_custom_call.1}
  #allocation0 [shape = 'u32[]', space=smem, size = 0x4, offset = 0x4, fixed_abs, tag = 'smem constant byte address 0x4 - core index']
  #allocation1 [shape = 'u32[144,128]{1,0:T(1,128)}', space=vmem, size = 0x12000, scoped, tag = 'internal scratch']
  #allocation2 [shape = 'f32[8,36]{1,0:T(8,128)}', space=vmem, size = 0x1000, scoped, tag = 'scratch operand']
  #allocation3 [shape = 'bf16[8,32]{1,0:T(8,128)(2,1)}', space=vmem, size = 0x800, scoped, tag = 'scratch operand']
  #allocation4 [shape = 'f32[8,36]{1,0:T(8,128)}', space=vmem, size = 0x1000, scoped, tag = 'scratch operand']
  %s0 = inlined_call_operand.hbm [shape: bf16[8,32], index: 0, kind: input, shape index: {}]
  %s1 = inlined_call_operand.hbm [shape: bf16[8,8], index: 1, kind: input, shape index: {}]
  %s2 = inlined_call_operand.hbm [shape: bf16[32,36], index: 2, kind: input, shape index: {}]
  %s3 = inlined_call_operand.vmem [shape: f32[4,32], index: 3, kind: input, shape index: {}]
  %s4 = inlined_call_operand.hbm [shape: bf16[32,36], index: 4, kind: input, shape index: {}]
  %s5 = inlined_call_operand.vmem [shape: f32[4,32], index: 5, kind: input, shape index: {}]
  %s6 = inlined_call_operand.hbm [shape: f32[8,32], index: 6, kind: output, shape index: {}]
  %s7 = sld [smem:[#allocation0]]
  $region50: #{tpu_custom_call.1} parent=0
    _
  %s9 = ssub.s32 1, %s7
  %s10 = scalar_select 0, %s9, %s7
  $region1: #{tpu_custom_call.1} parent=0
    #allocation5 [shape = 'u8[2048]{0}', space=vmem, size = 0x800, scoped, tag = 'input window, operand 0, single buffered']
    #allocation6 [shape = 's32[1]{0}', space=sflag, size = 0x4, scoped, tag = 'scoped memory for tpu_custom_call.1']
    #allocation7 [shape = 's32[1]{0}', space=sflag, size = 0x4, scoped, tag = 'scoped memory for tpu_custom_call.1']
    #allocation8 [shape = 'u8[2048]{0}', space=vmem, size = 0x800, scoped, tag = 'input window, operand 1, single buffered']
    #allocation9 [shape = 's32[1]{0}', space=sflag, size = 0x4, scoped, tag = 'scoped memory for tpu_custom_call.1']
    #allocation10 [shape = 'u8[8192]{0}', space=vmem, size = 0x2000, scoped, tag = 'input window, operand 2, single buffered']
    #allocation11 [shape = 'u8[8192]{0}', space=vmem, size = 0x2000, scoped, tag = 'input window, operand 4, single buffered']
    #allocation12 [shape = 's32[1]{0}', space=sflag, size = 0x4, scoped, tag = 'scoped memory for tpu_custom_call.1']
    #allocation13 [shape = 'u8[4096]{0}', space=vmem, size = 0x1000, scoped, tag = 'output window, operand 0, single buffered']
    %11 = vsyncpa [#allocation6], 0
    %12 = vsyncpa [#allocation9], 0
    %13 = vsyncpa [#allocation12], 0
    %14 = vsyncpa [#allocation7], 0
    // Predicated region
    $region2: #{tpu_custom_call.1} parent=1 // pred_check
      _
    $region3: #{tpu_custom_call.1} parent=1 // pred_check_branch
      %16 = sbr.rel (0) target = $region5
    $region4: #{tpu_custom_call.1} parent=1 // pred_region
      %s18 = ssub.s32 64, 64
      %19 = vsyncadd [#allocation6], %s18
      %s21 = sshll.u32 [#allocation5], 4
      %s22 = int_to_ptr.vmem [resolvable:$true] %s21
      %24 = dma.hbm_to_vmem [thread:$0]  %s0, 64, %s22, [#allocation6]
    $region5: #{tpu_custom_call.1} parent=1 // pred_fallthru
      _
    // Predicated region
    $region6: #{tpu_custom_call.1} parent=1 // pred_check
      _
    $region7: #{tpu_custom_call.1} parent=1 // pred_check_branch
      %26 = sbr.rel (0) target = $region9
    $region8: #{tpu_custom_call.1} parent=1 // pred_region
      %s28 = ssub.s32 64, 64
      %29 = vsyncadd [#allocation9], %s28
      %s31 = sshll.u32 [#allocation8], 4
      %s32 = int_to_ptr.vmem [resolvable:$true] %s31
      %34 = dma.hbm_to_vmem [thread:$0]  %s1, 64, %s32, [#allocation9]
    $region9: #{tpu_custom_call.1} parent=1 // pred_fallthru
      _
    // Predicated region
    $region10: #{tpu_custom_call.1} parent=1 // pred_check
      _
    $region11: #{tpu_custom_call.1} parent=1 // pred_check_branch
      %36 = sbr.rel (0) target = $region13
    $region12: #{tpu_custom_call.1} parent=1 // pred_region
      %s38 = ssub.s32 256, 256
      %39 = vsyncadd [#allocation9], %s38
      %s40 = sshll.u32 [#allocation10], 4
      %s41 = int_to_ptr.vmem [resolvable:$true] %s40
      %46 = dma.hbm_to_vmem [thread:$0]  %s2, 256, %s41, [#allocation9], 64, 64, 4
    $region13: #{tpu_custom_call.1} parent=1 // pred_fallthru
      _
    // Predicated region
    $region14: #{tpu_custom_call.1} parent=1 // pred_check
      _
    $region15: #{tpu_custom_call.1} parent=1 // pred_check_branch
      %48 = sbr.rel (0) target = $region17
    $region16: #{tpu_custom_call.1} parent=1 // pred_region
      _
    $region17: #{tpu_custom_call.1} parent=1 // pred_fallthru
      _
    // Predicated region
    $region18: #{tpu_custom_call.1} parent=1 // pred_check
      _
    $region19: #{tpu_custom_call.1} parent=1 // pred_check_branch
      %50 = sbr.rel (0) target = $region21
    $region20: #{tpu_custom_call.1} parent=1 // pred_region
      %s52 = ssub.s32 256, 256
      %53 = vsyncadd [#allocation12], %s52
      %s54 = sshll.u32 [#allocation11], 4
      %s55 = int_to_ptr.vmem [resolvable:$true] %s54
      %60 = dma.hbm_to_vmem [thread:$0]  %s4, 256, %s55, [#allocation12], 64, 64, 4
    $region21: #{tpu_custom_call.1} parent=1 // pred_fallthru
      _
    // Predicated region
    $region22: #{tpu_custom_call.1} parent=1 // pred_check
      _
    $region23: #{tpu_custom_call.1} parent=1 // pred_check_branch
      %62 = sbr.rel (0) target = $region25
    $region24: #{tpu_custom_call.1} parent=1 // pred_region
      _
    $region25: #{tpu_custom_call.1} parent=1 // pred_fallthru
      _
    // Predicated region
    $region26: #{tpu_custom_call.1} parent=1 // pred_check
      _
    $region27: #{tpu_custom_call.1} parent=1 // pred_check_branch
      %64 = sbr.rel (0) target = $region29
    $region28: #{tpu_custom_call.1} parent=1 // pred_region
      %65 = dma.done [#allocation6], 64
    $region29: #{tpu_custom_call.1} parent=1 // pred_fallthru
      _
    // Predicated region
    $region30: #{tpu_custom_call.1} parent=1 // pred_check
      _
    $region31: #{tpu_custom_call.1} parent=1 // pred_check_branch
      %67 = sbr.rel (0) target = $region33
    $region32: #{tpu_custom_call.1} parent=1 // pred_region
      %68 = dma.done [#allocation9], 64
    $region33: #{tpu_custom_call.1} parent=1 // pred_fallthru
      _
    // Predicated region
    $region34: #{tpu_custom_call.1} parent=1 // pred_check
      _
    $region35: #{tpu_custom_call.1} parent=1 // pred_check_branch
      %70 = sbr.rel (0) target = $region37
    $region36: #{tpu_custom_call.1} parent=1 // pred_region
      %71 = dma.done [#allocation9], 256
    $region37: #{tpu_custom_call.1} parent=1 // pred_fallthru
      _
    // Predicated region
    $region38: #{tpu_custom_call.1} parent=1 // pred_check
      _
    $region39: #{tpu_custom_call.1} parent=1 // pred_check_branch
      %73 = sbr.rel (0) target = $region41
    $region40: #{tpu_custom_call.1} parent=1 // pred_region
      %74 = dma.done [#allocation12], 256
    $region41: #{tpu_custom_call.1} parent=1 // pred_fallthru
      _
    %v76 = vld [vmem:[#allocation5] sm:$0xf]
    %v77 = vld [vmem:[#allocation10] sm:$0xf]
    %v78 = vld [vmem:[#allocation10 + $0x4] sm:$0xf]
    %v79 = vld [vmem:[#allocation10 + $0x8] sm:$0xf]
    %v80 = vld [vmem:[#allocation10 + $0xc] sm:$0xf]
    %v85 = vunpack.c.l.b16 %v77
    %v86 = vunpack.c.l.b16 %v78
    %v87 = vunpack.c.l.b16 %v79
    %v88 = vunpack.c.l.b16 %v80
    %v89 = vpack.c.b16 %v86, %v85
    %v90 = vpack.c.b16 %v88, %v87
    %vm93 = vcmask 261120
    %v95 = vsel %vm93, %v76, 0
    %97 = vmatprep.subr.bf16.mxu0 0
    %98 = vmatpush1.bf16.msra.mxu0 %v89
    %99 = vmatprep.subr.bf16.mxu0 0
    %100 = vmatpush1.bf16.msra.mxu0 %v90
    %101 = vmatprep.subr.bf16.mxu0 0
    %102 = vmatpush1.bf16.msra.mxu0 0
    %103 = vmatprep.subr.bf16.mxu0 0
    %104 = vmatpush1.bf16.msra.mxu0 0
    %105 = vmatprep.subr.bf16.mxu0 0
    %106 = vmatpush1.bf16.msra.mxu0 0
    %107 = vmatprep.subr.bf16.mxu0 0
    %108 = vmatpush1.bf16.msra.mxu0 0
    %109 = vmatprep.subr.bf16.mxu0 0
    %110 = vmatpush1.bf16.msra.mxu0 0
    %111 = vmatprep.subr.bf16.mxu0 0
    %112 = vmatpush1.bf16.msra.mxu0 0
    %113 = vmatprep.subr.bf16.mxu0 0
    %114 = vmatpush1.bf16.msra.mxu0 0
    %115 = vmatprep.subr.bf16.mxu0 0
    %116 = vmatpush1.bf16.msra.mxu0 0
    %117 = vmatprep.subr.bf16.mxu0 0
    %118 = vmatpush1.bf16.msra.mxu0 0
    %119 = vmatprep.subr.bf16.mxu0 0
    %120 = vmatpush1.bf16.msra.mxu0 0
    %121 = vmatprep.subr.bf16.mxu0 0
    %122 = vmatpush1.bf16.msra.mxu0 0
    %123 = vmatprep.subr.bf16.mxu0 0
    %124 = vmatpush1.bf16.msra.mxu0 0
    %125 = vmatprep.subr.bf16.mxu0 0
    %126 = vmatpush1.bf16.msra.mxu0 0
    %127 = vmatprep.subr.bf16.mxu0 0
    %128 = vmatpush1.bf16.msra.mxu0 0
    %129 = vmatprep.mubr.bf16.mxu0 0
    %130 = vmatmul.mubr.bf16.gmra.mrb[0].mxu0 %v95
    %v131 = vpop.f32.mrb[0].mxu0
    %v132 = vadd.f32 0.0, %v131
    %v133 = vpop.f32.mrb[0].mxu0
    %v134 = vpop.f32.mrb[0].mxu0
    %v135 = vpop.f32.mrb[0].mxu0
    %136 = vdwg.mxu0
    %vm137 = vcmask 293888
    %138 = vst.msk [vmem:[#allocation2] sm:$0xff] %vm137, %v132
    %v139 = vld [vmem:[%s3] sm:$0xf]
    %v140 = vld [vmem:[#allocation2] sm:$0xff]
    %v142 = vsel %vm93, %v139, 0
    %v145 = vsel %vm93, %v140, 0
    %147 = vmatprep.subr.mxu0 0.0
    %148 = vmatpush1.xpose.msra.mxu0 %v145
    %149 = vmatprep.subr.mxu0 0.0
    %150 = vmatpush1.xpose.msra.mxu0 0.0
    %151 = vmatprep.subr.mxu0 0.0
    %152 = vmatpush1.xpose.msra.mxu0 0.0
    %153 = vmatprep.subr.mxu0 0.0
    %154 = vmatpush1.xpose.msra.mxu0 0.0
    %155 = vmatprep.subr.mxu0 0.0
    %156 = vmatpush1.xpose.msra.mxu0 0.0
    %157 = vmatprep.subr.mxu0 0.0
    %158 = vmatpush1.xpose.msra.mxu0 0.0
    %159 = vmatprep.subr.mxu0 0.0
    %160 = vmatpush1.xpose.msra.mxu0 0.0
    %161 = vmatprep.subr.mxu0 0.0
    %162 = vmatpush1.xpose.msra.mxu0 0.0
    %163 = vmatprep.subr.mxu0 0.0
    %164 = vmatpush1.xpose.msra.mxu0 0.0
    %165 = vmatprep.subr.mxu0 0.0
    %166 = vmatpush1.xpose.msra.mxu0 0.0
    %167 = vmatprep.subr.mxu0 0.0
    %168 = vmatpush1.xpose.msra.mxu0 0.0
    %169 = vmatprep.subr.mxu0 0.0
    %170 = vmatpush1.xpose.msra.mxu0 0.0
    %171 = vmatprep.subr.mxu0 0.0
    %172 = vmatpush1.xpose.msra.mxu0 0.0
    %173 = vmatprep.subr.mxu0 0.0
    %174 = vmatpush1.xpose.msra.mxu0 0.0
    %175 = vmatprep.subr.mxu0 0.0
    %176 = vmatpush1.xpose.msra.mxu0 0.0
    %177 = vmatprep.subr.mxu0 0.0
    %178 = vmatpush1.xpose.msra.mxu0 0.0
    %179 = vmatprep.subr.mxu0 0.0
    %180 = vmatpush1.xpose.msra.mxu0 0.0
    %181 = vmatprep.subr.mxu0 0.0
    %182 = vmatpush1.xpose.msra.mxu0 0.0
    %183 = vmatprep.subr.mxu0 0.0
    %184 = vmatpush1.xpose.msra.mxu0 0.0
    %185 = vmatprep.subr.mxu0 0.0
    %186 = vmatpush1.xpose.msra.mxu0 0.0
    %187 = vmatprep.subr.mxu0 0.0
    %188 = vmatpush1.xpose.msra.mxu0 0.0
    %189 = vmatprep.subr.mxu0 0.0
    %190 = vmatpush1.xpose.msra.mxu0 0.0
    %191 = vmatprep.subr.mxu0 0.0
    %192 = vmatpush1.xpose.msra.mxu0 0.0
    %193 = vmatprep.subr.mxu0 0.0
    %194 = vmatpush1.xpose.msra.mxu0 0.0
    %195 = vmatprep.subr.mxu0 0.0
    %196 = vmatpush1.xpose.msra.mxu0 0.0
    %197 = vmatprep.subr.mxu0 0.0
    %198 = vmatpush1.xpose.msra.mxu0 0.0
    %199 = vmatprep.subr.mxu0 0.0
    %200 = vmatpush1.xpose.msra.mxu0 0.0
    %201 = vmatprep.subr.mxu0 0.0
    %202 = vmatpush1.xpose.msra.mxu0 0.0
    %203 = vmatprep.subr.mxu0 0.0
    %204 = vmatpush1.xpose.msra.mxu0 0.0
    %205 = vmatprep.subr.mxu0 0.0
    %206 = vmatpush1.xpose.msra.mxu0 0.0
    %207 = vmatprep.subr.mxu0 0.0
    %208 = vmatpush1.xpose.msra.mxu0 0.0
    %209 = vmatprep.subr.mxu0 0.0
    %210 = vmatpush1.xpose.msra.mxu0 0.0
    %211 = vmatprep.mubr.f32.mxu0 0.0
    %212 = vmatmul.mubr.f32.gmra.mrb[0].mxu0 %v142
    %v213 = vpop.f32.mrb[0].mxu0
    %v214 = vadd.f32 0.0, %v213
    %v215 = vpop.f32.mrb[0].mxu0
    %216 = vdwg.mxu0
    %217 = vset.pattern.permute.xlu0 32
    %218 = vperm.xlu0 %217, %v140
    %v219 = vpop.permute.xlu0 %218
    %v221 = vlaneseq
    %v222 = vshrl.u32 %v221, 7
    %v223 = vsub.s32 0, %v222
    %v224 = vrot.slane %v214, %v223
    %v225 = vadd.f32 %v219, %v224
    %v226 = vmul.f32 %v225, 0.2
    %v227 = vmax.f32 %v225, %v226
    %v228 = vld [vmem:[#allocation8] sm:$0xf]
    %v229 = vunpack.c.l.bf16 %v228
    %v230 = vadd.f32 %v227, %v229
    %vm231 = vcmask 64512
    %v232 = vsel %vm231, %v230, -inf
    %233 = vmax.xlane.f32.xlu0 %v232
    %v234 = vpop.xlane.xlu0 %233
    %v235 = vsub.f32 %v230, %v234
    %v236 = vmul.f32 %v235, 1.442695
    %v237 = vpow.pop %v236
    %v238 = vsel %vm231, %v237, 0.0
    %239 = vadd.xlane.f32.xlu0 %v238
    %v240 = vpop.xlane.xlu0 %239
    %v241 = vpack.c.bf16 %v140, %v140
    %v242 = vpack.c.bf16 %v237, %v237
    %v244 = vsel %vm231, %v242, 0
    %vm246 = vcmask 1043456
    %v248 = vsel %vm246, %v241, 0
    %250 = vmatprep.subr.bf16.mxu0 0
    %251 = vmatpush1.bf16.msra.mxu0 %v248
    %252 = vmatprep.subr.bf16.mxu0 0
    %253 = vmatpush1.bf16.msra.mxu0 0
    %254 = vmatprep.subr.bf16.mxu0 0
    %255 = vmatpush1.bf16.msra.mxu0 0
    %256 = vmatprep.subr.bf16.mxu0 0
    %257 = vmatpush1.bf16.msra.mxu0 0
    %258 = vmatprep.subr.bf16.mxu0 0
    %259 = vmatpush1.bf16.msra.mxu0 0
    %260 = vmatprep.subr.bf16.mxu0 0
    %261 = vmatpush1.bf16.msra.mxu0 0
    %262 = vmatprep.subr.bf16.mxu0 0
    %263 = vmatpush1.bf16.msra.mxu0 0
    %264 = vmatprep.subr.bf16.mxu0 0
    %265 = vmatpush1.bf16.msra.mxu0 0
    %266 = vmatprep.subr.bf16.mxu0 0
    %267 = vmatpush1.bf16.msra.mxu0 0
    %268 = vmatprep.subr.bf16.mxu0 0
    %269 = vmatpush1.bf16.msra.mxu0 0
    %270 = vmatprep.subr.bf16.mxu0 0
    %271 = vmatpush1.bf16.msra.mxu0 0
    %272 = vmatprep.subr.bf16.mxu0 0
    %273 = vmatpush1.bf16.msra.mxu0 0
    %274 = vmatprep.subr.bf16.mxu0 0
    %275 = vmatpush1.bf16.msra.mxu0 0
    %276 = vmatprep.subr.bf16.mxu0 0
    %277 = vmatpush1.bf16.msra.mxu0 0
    %278 = vmatprep.subr.bf16.mxu0 0
    %279 = vmatpush1.bf16.msra.mxu0 0
    %280 = vmatprep.subr.bf16.mxu0 0
    %281 = vmatpush1.bf16.msra.mxu0 0
    %282 = vmatprep.mubr.bf16.mxu0 0
    %283 = vmatmul.mubr.bf16.gmra.mrb[0].mxu0 %v244
    %v284 = vpop.f32.mrb[0].mxu0
    %v285 = vadd.f32 0.0, %v284
    %v286 = vpop.f32.mrb[0].mxu0
    %v287 = vpop.f32.mrb[0].mxu0
    %v288 = vpop.f32.mrb[0].mxu0
    %289 = vdwg.mxu0
    %v290 = vrcp.pop %v240
    %v291 = vmul.f32 %v285, %v290
    %vm292 = vcmp.gt.f32.partialorder %v291, 0.0
    %v293 = vmul.f32 %v291, 1.442695
    %v294 = vpow.pop %v293
    %v295 = vsub.f32 %v294, 1.0
    %v296 = vsel %vm292, %v291, %v295
    %297 = vset.pattern.permute.xlu0 33
    %298 = vperm.xlu0 %297, %v140
    %v299 = vpop.permute.xlu0 %298
    %v301 = vlaneseq
    %v302 = vshrl.u32 %v301, 7
    %v303 = vsub.s32 1, %v302
    %v304 = vrot.slane %v214, %v303
    %v305 = vadd.f32 %v299, %v304
    %v306 = vmul.f32 %v305, 0.2
    %v307 = vmax.f32 %v305, %v306
    %v308 = vadd.f32 %v307, %v229
    %v309 = vsel %vm231, %v308, -inf
    %310 = vmax.xlane.f32.xlu0 %v309
    %v311 = vpop.xlane.xlu0 %310
    %v312 = vsub.f32 %v308, %v311
    %v313 = vmul.f32 %v312, 1.442695
    %v314 = vpow.pop %v313
    %v315 = vsel %vm231, %v314, 0.0
    %316 = vadd.xlane.f32.xlu0 %v315
    %v317 = vpop.xlane.xlu0 %316
    %v318 = vpack.c.bf16 %v314, %v314
    %320 = vrot.lane.b32.xlu0 %v241, 120
    %v321 = vpop.permute.xlu0 %320
    %v323 = vsel %vm231, %v318, 0
    %v326 = vsel %vm246, %v321, 0
    %328 = vmatprep.subr.bf16.mxu0 0
    %329 = vmatpush1.bf16.msra.mxu0 %v326
    %330 = vmatprep.subr.bf16.mxu0 0
    %331 = vmatpush1.bf16.msra.mxu0 0
    %332 = vmatprep.subr.bf16.mxu0 0
    %333 = vmatpush1.bf16.msra.mxu0 0
    %334 = vmatprep.subr.bf16.mxu0 0
    %335 = vmatpush1.bf16.msra.mxu0 0
    %336 = vmatprep.subr.bf16.mxu0 0
    %337 = vmatpush1.bf16.msra.mxu0 0
    %338 = vmatprep.subr.bf16.mxu0 0
    %339 = vmatpush1.bf16.msra.mxu0 0
    %340 = vmatprep.subr.bf16.mxu0 0
    %341 = vmatpush1.bf16.msra.mxu0 0
    %342 = vmatprep.subr.bf16.mxu0 0
    %343 = vmatpush1.bf16.msra.mxu0 0
    %344 = vmatprep.subr.bf16.mxu0 0
    %345 = vmatpush1.bf16.msra.mxu0 0
    %346 = vmatprep.subr.bf16.mxu0 0
    %347 = vmatpush1.bf16.msra.mxu0 0
    %348 = vmatprep.subr.bf16.mxu0 0
    %349 = vmatpush1.bf16.msra.mxu0 0
    %350 = vmatprep.subr.bf16.mxu0 0
    %351 = vmatpush1.bf16.msra.mxu0 0
    %352 = vmatprep.subr.bf16.mxu0 0
    %353 = vmatpush1.bf16.msra.mxu0 0
    %354 = vmatprep.subr.bf16.mxu0 0
    %355 = vmatpush1.bf16.msra.mxu0 0
    %356 = vmatprep.subr.bf16.mxu0 0
    %357 = vmatpush1.bf16.msra.mxu0 0
    %358 = vmatprep.subr.bf16.mxu0 0
    %359 = vmatpush1.bf16.msra.mxu0 0
    %360 = vmatprep.mubr.bf16.mxu0 0
    %361 = vmatmul.mubr.bf16.gmra.mrb[0].mxu0 %v323
    %v362 = vpop.f32.mrb[0].mxu0
    %v363 = vadd.f32 0.0, %v362
    %v364 = vpop.f32.mrb[0].mxu0
    %v365 = vpop.f32.mrb[0].mxu0
    %v366 = vpop.f32.mrb[0].mxu0
    %367 = vdwg.mxu0
    %v368 = vrcp.pop %v317
    %v369 = vmul.f32 %v363, %v368
    %vm370 = vcmp.gt.f32.partialorder %v369, 0.0
    %v371 = vmul.f32 %v369, 1.442695
    %v372 = vpow.pop %v371
    %v373 = vsub.f32 %v372, 1.0
    %v374 = vsel %vm370, %v369, %v373
    %375 = vset.pattern.permute.xlu0 34
    %376 = vperm.xlu0 %375, %v140
    %v377 = vpop.permute.xlu0 %376
    %v379 = vlaneseq
    %v380 = vshrl.u32 %v379, 7
    %v381 = vsub.s32 2, %v380
    %v382 = vrot.slane %v214, %v381
    %v383 = vadd.f32 %v377, %v382
    %v384 = vmul.f32 %v383, 0.2
    %v385 = vmax.f32 %v383, %v384
    %v386 = vadd.f32 %v385, %v229
    %v387 = vsel %vm231, %v386, -inf
    %388 = vmax.xlane.f32.xlu0 %v387
    %v389 = vpop.xlane.xlu0 %388
    %v390 = vsub.f32 %v386, %v389
    %v391 = vmul.f32 %v390, 1.442695
    %v392 = vpow.pop %v391
    %v393 = vsel %vm231, %v392, 0.0
    %394 = vadd.xlane.f32.xlu0 %v393
    %v395 = vpop.xlane.xlu0 %394
    %v396 = vpack.c.bf16 %v392, %v392
    %397 = vrot.lane.b32.xlu0 %v241, 112
    %v398 = vpop.permute.xlu0 %397
    %v400 = vsel %vm231, %v396, 0
    %v403 = vsel %vm246, %v398, 0
    %405 = vmatprep.subr.bf16.mxu0 0
    %406 = vmatpush1.bf16.msra.mxu0 %v403
    %407 = vmatprep.subr.bf16.mxu0 0
    %408 = vmatpush1.bf16.msra.mxu0 0
    %409 = vmatprep.subr.bf16.mxu0 0
    %410 = vmatpush1.bf16.msra.mxu0 0
    %411 = vmatprep.subr.bf16.mxu0 0
    %412 = vmatpush1.bf16.msra.mxu0 0
    %413 = vmatprep.subr.bf16.mxu0 0
    %414 = vmatpush1.bf16.msra.mxu0 0
    %415 = vmatprep.subr.bf16.mxu0 0
    %416 = vmatpush1.bf16.msra.mxu0 0
    %417 = vmatprep.subr.bf16.mxu0 0
    %418 = vmatpush1.bf16.msra.mxu0 0
    %419 = vmatprep.subr.bf16.mxu0 0
    %420 = vmatpush1.bf16.msra.mxu0 0
    %421 = vmatprep.subr.bf16.mxu0 0
    %422 = vmatpush1.bf16.msra.mxu0 0
    %423 = vmatprep.subr.bf16.mxu0 0
    %424 = vmatpush1.bf16.msra.mxu0 0
    %425 = vmatprep.subr.bf16.mxu0 0
    %426 = vmatpush1.bf16.msra.mxu0 0
    %427 = vmatprep.subr.bf16.mxu0 0
    %428 = vmatpush1.bf16.msra.mxu0 0
    %429 = vmatprep.subr.bf16.mxu0 0
    %430 = vmatpush1.bf16.msra.mxu0 0
    %431 = vmatprep.subr.bf16.mxu0 0
    %432 = vmatpush1.bf16.msra.mxu0 0
    %433 = vmatprep.subr.bf16.mxu0 0
    %434 = vmatpush1.bf16.msra.mxu0 0
    %435 = vmatprep.subr.bf16.mxu0 0
    %436 = vmatpush1.bf16.msra.mxu0 0
    %437 = vmatprep.mubr.bf16.mxu0 0
    %438 = vmatmul.mubr.bf16.gmra.mrb[0].mxu0 %v400
    %v439 = vpop.f32.mrb[0].mxu0
    %v440 = vadd.f32 0.0, %v439
    %v441 = vpop.f32.mrb[0].mxu0
    %v442 = vpop.f32.mrb[0].mxu0
    %v443 = vpop.f32.mrb[0].mxu0
    %444 = vdwg.mxu0
    %v445 = vrcp.pop %v395
    %v446 = vmul.f32 %v440, %v445
    %vm447 = vcmp.gt.f32.partialorder %v446, 0.0
    %v448 = vmul.f32 %v446, 1.442695
    %v449 = vpow.pop %v448
    %v450 = vsub.f32 %v449, 1.0
    %v451 = vsel %vm447, %v446, %v450
    %452 = vset.pattern.permute.xlu0 35
    %453 = vperm.xlu0 %452, %v140
    %v454 = vpop.permute.xlu0 %453
    %v456 = vlaneseq
    %v457 = vshrl.u32 %v456, 7
    %v458 = vsub.s32 3, %v457
    %v459 = vrot.slane %v214, %v458
    %v460 = vadd.f32 %v454, %v459
    %v461 = vmul.f32 %v460, 0.2
    %v462 = vmax.f32 %v460, %v461
    %v463 = vadd.f32 %v462, %v229
    %v464 = vsel %vm231, %v463, -inf
    %465 = vmax.xlane.f32.xlu0 %v464
    %v466 = vpop.xlane.xlu0 %465
    %v467 = vsub.f32 %v463, %v466
    %v468 = vmul.f32 %v467, 1.442695
    %v469 = vpow.pop %v468
    %v470 = vsel %vm231, %v469, 0.0
    %471 = vadd.xlane.f32.xlu0 %v470
    %v472 = vpop.xlane.xlu0 %471
    %v473 = vpack.c.bf16 %v469, %v469
    %474 = vrot.lane.b32.xlu0 %v241, 104
    %v475 = vpop.permute.xlu0 %474
    %v477 = vsel %vm231, %v473, 0
    %v480 = vsel %vm246, %v475, 0
    %482 = vmatprep.subr.bf16.mxu0 0
    %483 = vmatpush1.bf16.msra.mxu0 %v480
    %484 = vmatprep.subr.bf16.mxu0 0
    %485 = vmatpush1.bf16.msra.mxu0 0
    %486 = vmatprep.subr.bf16.mxu0 0
    %487 = vmatpush1.bf16.msra.mxu0 0
    %488 = vmatprep.subr.bf16.mxu0 0
    %489 = vmatpush1.bf16.msra.mxu0 0
    %490 = vmatprep.subr.bf16.mxu0 0
    %491 = vmatpush1.bf16.msra.mxu0 0
    %492 = vmatprep.subr.bf16.mxu0 0
    %493 = vmatpush1.bf16.msra.mxu0 0
    %494 = vmatprep.subr.bf16.mxu0 0
    %495 = vmatpush1.bf16.msra.mxu0 0
    %496 = vmatprep.subr.bf16.mxu0 0
    %497 = vmatpush1.bf16.msra.mxu0 0
    %498 = vmatprep.subr.bf16.mxu0 0
    %499 = vmatpush1.bf16.msra.mxu0 0
    %500 = vmatprep.subr.bf16.mxu0 0
    %501 = vmatpush1.bf16.msra.mxu0 0
    %502 = vmatprep.subr.bf16.mxu0 0
    %503 = vmatpush1.bf16.msra.mxu0 0
    %504 = vmatprep.subr.bf16.mxu0 0
    %505 = vmatpush1.bf16.msra.mxu0 0
    %506 = vmatprep.subr.bf16.mxu0 0
    %507 = vmatpush1.bf16.msra.mxu0 0
    %508 = vmatprep.subr.bf16.mxu0 0
    %509 = vmatpush1.bf16.msra.mxu0 0
    %510 = vmatprep.subr.bf16.mxu0 0
    %511 = vmatpush1.bf16.msra.mxu0 0
    %512 = vmatprep.subr.bf16.mxu0 0
    %513 = vmatpush1.bf16.msra.mxu0 0
    %514 = vmatprep.mubr.bf16.mxu0 0
    %515 = vmatmul.mubr.bf16.gmra.mrb[0].mxu0 %v477
    %v516 = vpop.f32.mrb[0].mxu0
    %v517 = vadd.f32 0.0, %v516
    %v518 = vpop.f32.mrb[0].mxu0
    %v519 = vpop.f32.mrb[0].mxu0
    %v520 = vpop.f32.mrb[0].mxu0
    %521 = vdwg.mxu0
    %v522 = vrcp.pop %v472
    %v523 = vmul.f32 %v517, %v522
    %vm524 = vcmp.gt.f32.partialorder %v523, 0.0
    %v525 = vmul.f32 %v523, 1.442695
    %v526 = vpow.pop %v525
    %v527 = vsub.f32 %v526, 1.0
    %v528 = vsel %vm524, %v523, %v527
    %530 = vrot.lane.b32.xlu0 %v374, 8
    %v531 = vpop.permute.xlu0 %530
    %534 = vrot.lane.b32.xlu0 %v451, 16
    %v535 = vpop.permute.xlu0 %534
    %538 = vrot.lane.b32.xlu0 %v528, 24
    %v539 = vpop.permute.xlu0 %538
    %v541 = vsel %vm231, %v296, %v531
    %vm542 = vcmask 130048
    %v543 = vsel %vm542, %v541, %v535
    %vm544 = vcmask 195584
    %v545 = vsel %vm544, %v543, %v539
    %v546 = vpack.c.bf16 %v545, %v545
    %vm547 = vcmask 257024
    %548 = vst.msk [vmem:[#allocation3] sm:$0xf] %vm547, %v546
    %v549 = vld [vmem:[#allocation3] sm:$0xf]
    %v550 = vld [vmem:[#allocation11] sm:$0xf]
    %v551 = vld [vmem:[#allocation11 + $0x4] sm:$0xf]
    %v552 = vld [vmem:[#allocation11 + $0x8] sm:$0xf]
    %v553 = vld [vmem:[#allocation11 + $0xc] sm:$0xf]
    %v558 = vunpack.c.l.b16 %v550
    %v559 = vunpack.c.l.b16 %v551
    %v560 = vunpack.c.l.b16 %v552
    %v561 = vunpack.c.l.b16 %v553
    %v562 = vpack.c.b16 %v559, %v558
    %v563 = vpack.c.b16 %v561, %v560
    %v567 = vsel %vm93, %v549, 0
    %569 = vmatprep.subr.bf16.mxu0 0
    %570 = vmatpush1.bf16.msra.mxu0 %v562
    %571 = vmatprep.subr.bf16.mxu0 0
    %572 = vmatpush1.bf16.msra.mxu0 %v563
    %573 = vmatprep.subr.bf16.mxu0 0
    %574 = vmatpush1.bf16.msra.mxu0 0
    %575 = vmatprep.subr.bf16.mxu0 0
    %576 = vmatpush1.bf16.msra.mxu0 0
    %577 = vmatprep.subr.bf16.mxu0 0
    %578 = vmatpush1.bf16.msra.mxu0 0
    %579 = vmatprep.subr.bf16.mxu0 0
    %580 = vmatpush1.bf16.msra.mxu0 0
    %581 = vmatprep.subr.bf16.mxu0 0
    %582 = vmatpush1.bf16.msra.mxu0 0
    %583 = vmatprep.subr.bf16.mxu0 0
    %584 = vmatpush1.bf16.msra.mxu0 0
    %585 = vmatprep.subr.bf16.mxu0 0
    %586 = vmatpush1.bf16.msra.mxu0 0
    %587 = vmatprep.subr.bf16.mxu0 0
    %588 = vmatpush1.bf16.msra.mxu0 0
    %589 = vmatprep.subr.bf16.mxu0 0
    %590 = vmatpush1.bf16.msra.mxu0 0
    %591 = vmatprep.subr.bf16.mxu0 0
    %592 = vmatpush1.bf16.msra.mxu0 0
    %593 = vmatprep.subr.bf16.mxu0 0
    %594 = vmatpush1.bf16.msra.mxu0 0
    %595 = vmatprep.subr.bf16.mxu0 0
    %596 = vmatpush1.bf16.msra.mxu0 0
    %597 = vmatprep.subr.bf16.mxu0 0
    %598 = vmatpush1.bf16.msra.mxu0 0
    %599 = vmatprep.subr.bf16.mxu0 0
    %600 = vmatpush1.bf16.msra.mxu0 0
    %601 = vmatprep.mubr.bf16.mxu0 0
    %602 = vmatmul.mubr.bf16.gmra.mrb[0].mxu0 %v567
    %v603 = vpop.f32.mrb[0].mxu0
    %v604 = vadd.f32 0.0, %v603
    %v605 = vpop.f32.mrb[0].mxu0
    %v606 = vpop.f32.mrb[0].mxu0
    %v607 = vpop.f32.mrb[0].mxu0
    %608 = vdwg.mxu0
    %609 = vst.msk [vmem:[#allocation4] sm:$0xff] %vm137, %v604
    %v610 = vld [vmem:[%s5] sm:$0xf]
    %v611 = vld [vmem:[#allocation4] sm:$0xff]
    %v613 = vsel %vm93, %v610, 0
    %v616 = vsel %vm93, %v611, 0
    %618 = vmatprep.subr.mxu0 0.0
    %619 = vmatpush1.xpose.msra.mxu0 %v616
    %620 = vmatprep.subr.mxu0 0.0
    %621 = vmatpush1.xpose.msra.mxu0 0.0
    %622 = vmatprep.subr.mxu0 0.0
    %623 = vmatpush1.xpose.msra.mxu0 0.0
    %624 = vmatprep.subr.mxu0 0.0
    %625 = vmatpush1.xpose.msra.mxu0 0.0
    %626 = vmatprep.subr.mxu0 0.0
    %627 = vmatpush1.xpose.msra.mxu0 0.0
    %628 = vmatprep.subr.mxu0 0.0
    %629 = vmatpush1.xpose.msra.mxu0 0.0
    %630 = vmatprep.subr.mxu0 0.0
    %631 = vmatpush1.xpose.msra.mxu0 0.0
    %632 = vmatprep.subr.mxu0 0.0
    %633 = vmatpush1.xpose.msra.mxu0 0.0
    %634 = vmatprep.subr.mxu0 0.0
    %635 = vmatpush1.xpose.msra.mxu0 0.0
    %636 = vmatprep.subr.mxu0 0.0
    %637 = vmatpush1.xpose.msra.mxu0 0.0
    %638 = vmatprep.subr.mxu0 0.0
    %639 = vmatpush1.xpose.msra.mxu0 0.0
    %640 = vmatprep.subr.mxu0 0.0
    %641 = vmatpush1.xpose.msra.mxu0 0.0
    %642 = vmatprep.subr.mxu0 0.0
    %643 = vmatpush1.xpose.msra.mxu0 0.0
    %644 = vmatprep.subr.mxu0 0.0
    %645 = vmatpush1.xpose.msra.mxu0 0.0
    %646 = vmatprep.subr.mxu0 0.0
    %647 = vmatpush1.xpose.msra.mxu0 0.0
    %648 = vmatprep.subr.mxu0 0.0
    %649 = vmatpush1.xpose.msra.mxu0 0.0
    %650 = vmatprep.subr.mxu0 0.0
    %651 = vmatpush1.xpose.msra.mxu0 0.0
    %652 = vmatprep.subr.mxu0 0.0
    %653 = vmatpush1.xpose.msra.mxu0 0.0
    %654 = vmatprep.subr.mxu0 0.0
    %655 = vmatpush1.xpose.msra.mxu0 0.0
    %656 = vmatprep.subr.mxu0 0.0
    %657 = vmatpush1.xpose.msra.mxu0 0.0
    %658 = vmatprep.subr.mxu0 0.0
    %659 = vmatpush1.xpose.msra.mxu0 0.0
    %660 = vmatprep.subr.mxu0 0.0
    %661 = vmatpush1.xpose.msra.mxu0 0.0
    %662 = vmatprep.subr.mxu0 0.0
    %663 = vmatpush1.xpose.msra.mxu0 0.0
    %664 = vmatprep.subr.mxu0 0.0
    %665 = vmatpush1.xpose.msra.mxu0 0.0
    %666 = vmatprep.subr.mxu0 0.0
    %667 = vmatpush1.xpose.msra.mxu0 0.0
    %668 = vmatprep.subr.mxu0 0.0
    %669 = vmatpush1.xpose.msra.mxu0 0.0
    %670 = vmatprep.subr.mxu0 0.0
    %671 = vmatpush1.xpose.msra.mxu0 0.0
    %672 = vmatprep.subr.mxu0 0.0
    %673 = vmatpush1.xpose.msra.mxu0 0.0
    %674 = vmatprep.subr.mxu0 0.0
    %675 = vmatpush1.xpose.msra.mxu0 0.0
    %676 = vmatprep.subr.mxu0 0.0
    %677 = vmatpush1.xpose.msra.mxu0 0.0
    %678 = vmatprep.subr.mxu0 0.0
    %679 = vmatpush1.xpose.msra.mxu0 0.0
    %680 = vmatprep.subr.mxu0 0.0
    %681 = vmatpush1.xpose.msra.mxu0 0.0
    %682 = vmatprep.mubr.f32.mxu0 0.0
    %683 = vmatmul.mubr.f32.gmra.mrb[0].mxu0 %v613
    %v684 = vpop.f32.mrb[0].mxu0
    %v685 = vadd.f32 0.0, %v684
    %v686 = vpop.f32.mrb[0].mxu0
    %687 = vdwg.mxu0
    %688 = vset.pattern.permute.xlu0 32
    %689 = vperm.xlu0 %688, %v611
    %v690 = vpop.permute.xlu0 %689
    %v692 = vlaneseq
    %v693 = vshrl.u32 %v692, 7
    %v694 = vsub.s32 0, %v693
    %v695 = vrot.slane %v685, %v694
    %v696 = vadd.f32 %v690, %v695
    %v697 = vmul.f32 %v696, 0.2
    %v698 = vmax.f32 %v696, %v697
    %v699 = vld [vmem:[#allocation8] sm:$0xf]
    %v700 = vunpack.c.l.bf16 %v699
    %v701 = vadd.f32 %v698, %v700
    %v702 = vsel %vm231, %v701, -inf
    %703 = vmax.xlane.f32.xlu0 %v702
    %v704 = vpop.xlane.xlu0 %703
    %v705 = vsub.f32 %v701, %v704
    %v706 = vmul.f32 %v705, 1.442695
    %v707 = vpow.pop %v706
    %v708 = vsel %vm231, %v707, 0.0
    %709 = vadd.xlane.f32.xlu0 %v708
    %v710 = vpop.xlane.xlu0 %709
    %v711 = vpack.c.bf16 %v611, %v611
    %v712 = vpack.c.bf16 %v707, %v707
    %v714 = vsel %vm231, %v712, 0
    %v717 = vsel %vm246, %v711, 0
    %719 = vmatprep.subr.bf16.mxu0 0
    %720 = vmatpush1.bf16.msra.mxu0 %v717
    %721 = vmatprep.subr.bf16.mxu0 0
    %722 = vmatpush1.bf16.msra.mxu0 0
    %723 = vmatprep.subr.bf16.mxu0 0
    %724 = vmatpush1.bf16.msra.mxu0 0
    %725 = vmatprep.subr.bf16.mxu0 0
    %726 = vmatpush1.bf16.msra.mxu0 0
    %727 = vmatprep.subr.bf16.mxu0 0
    %728 = vmatpush1.bf16.msra.mxu0 0
    %729 = vmatprep.subr.bf16.mxu0 0
    %730 = vmatpush1.bf16.msra.mxu0 0
    %731 = vmatprep.subr.bf16.mxu0 0
    %732 = vmatpush1.bf16.msra.mxu0 0
    %733 = vmatprep.subr.bf16.mxu0 0
    %734 = vmatpush1.bf16.msra.mxu0 0
    %735 = vmatprep.subr.bf16.mxu0 0
    %736 = vmatpush1.bf16.msra.mxu0 0
    %737 = vmatprep.subr.bf16.mxu0 0
    %738 = vmatpush1.bf16.msra.mxu0 0
    %739 = vmatprep.subr.bf16.mxu0 0
    %740 = vmatpush1.bf16.msra.mxu0 0
    %741 = vmatprep.subr.bf16.mxu0 0
    %742 = vmatpush1.bf16.msra.mxu0 0
    %743 = vmatprep.subr.bf16.mxu0 0
    %744 = vmatpush1.bf16.msra.mxu0 0
    %745 = vmatprep.subr.bf16.mxu0 0
    %746 = vmatpush1.bf16.msra.mxu0 0
    %747 = vmatprep.subr.bf16.mxu0 0
    %748 = vmatpush1.bf16.msra.mxu0 0
    %749 = vmatprep.subr.bf16.mxu0 0
    %750 = vmatpush1.bf16.msra.mxu0 0
    %751 = vmatprep.mubr.bf16.mxu0 0
    %752 = vmatmul.mubr.bf16.gmra.mrb[0].mxu0 %v714
    %v753 = vpop.f32.mrb[0].mxu0
    %v754 = vadd.f32 0.0, %v753
    %v755 = vpop.f32.mrb[0].mxu0
    %v756 = vpop.f32.mrb[0].mxu0
    %v757 = vpop.f32.mrb[0].mxu0
    %758 = vdwg.mxu0
    %v759 = vrcp.pop %v710
    %v760 = vmul.f32 %v754, %v759
    %761 = vset.pattern.permute.xlu0 33
    %762 = vperm.xlu0 %761, %v611
    %v763 = vpop.permute.xlu0 %762
    %v765 = vlaneseq
    %v766 = vshrl.u32 %v765, 7
    %v767 = vsub.s32 1, %v766
    %v768 = vrot.slane %v685, %v767
    %v769 = vadd.f32 %v763, %v768
    %v770 = vmul.f32 %v769, 0.2
    %v771 = vmax.f32 %v769, %v770
    %v772 = vadd.f32 %v771, %v700
    %v773 = vsel %vm231, %v772, -inf
    %774 = vmax.xlane.f32.xlu0 %v773
    %v775 = vpop.xlane.xlu0 %774
    %v776 = vsub.f32 %v772, %v775
    %v777 = vmul.f32 %v776, 1.442695
    %v778 = vpow.pop %v777
    %v779 = vsel %vm231, %v778, 0.0
    %780 = vadd.xlane.f32.xlu0 %v779
    %v781 = vpop.xlane.xlu0 %780
    %v782 = vpack.c.bf16 %v778, %v778
    %784 = vrot.lane.b32.xlu0 %v711, 120
    %v785 = vpop.permute.xlu0 %784
    %v787 = vsel %vm231, %v782, 0
    %v790 = vsel %vm246, %v785, 0
    %792 = vmatprep.subr.bf16.mxu0 0
    %793 = vmatpush1.bf16.msra.mxu0 %v790
    %794 = vmatprep.subr.bf16.mxu0 0
    %795 = vmatpush1.bf16.msra.mxu0 0
    %796 = vmatprep.subr.bf16.mxu0 0
    %797 = vmatpush1.bf16.msra.mxu0 0
    %798 = vmatprep.subr.bf16.mxu0 0
    %799 = vmatpush1.bf16.msra.mxu0 0
    %800 = vmatprep.subr.bf16.mxu0 0
    %801 = vmatpush1.bf16.msra.mxu0 0
    %802 = vmatprep.subr.bf16.mxu0 0
    %803 = vmatpush1.bf16.msra.mxu0 0
    %804 = vmatprep.subr.bf16.mxu0 0
    %805 = vmatpush1.bf16.msra.mxu0 0
    %806 = vmatprep.subr.bf16.mxu0 0
    %807 = vmatpush1.bf16.msra.mxu0 0
    %808 = vmatprep.subr.bf16.mxu0 0
    %809 = vmatpush1.bf16.msra.mxu0 0
    %810 = vmatprep.subr.bf16.mxu0 0
    %811 = vmatpush1.bf16.msra.mxu0 0
    %812 = vmatprep.subr.bf16.mxu0 0
    %813 = vmatpush1.bf16.msra.mxu0 0
    %814 = vmatprep.subr.bf16.mxu0 0
    %815 = vmatpush1.bf16.msra.mxu0 0
    %816 = vmatprep.subr.bf16.mxu0 0
    %817 = vmatpush1.bf16.msra.mxu0 0
    %818 = vmatprep.subr.bf16.mxu0 0
    %819 = vmatpush1.bf16.msra.mxu0 0
    %820 = vmatprep.subr.bf16.mxu0 0
    %821 = vmatpush1.bf16.msra.mxu0 0
    %822 = vmatprep.subr.bf16.mxu0 0
    %823 = vmatpush1.bf16.msra.mxu0 0
    %824 = vmatprep.mubr.bf16.mxu0 0
    %825 = vmatmul.mubr.bf16.gmra.mrb[0].mxu0 %v787
    %v826 = vpop.f32.mrb[0].mxu0
    %v827 = vadd.f32 0.0, %v826
    %v828 = vpop.f32.mrb[0].mxu0
    %v829 = vpop.f32.mrb[0].mxu0
    %v830 = vpop.f32.mrb[0].mxu0
    %831 = vdwg.mxu0
    %v832 = vrcp.pop %v781
    %v833 = vmul.f32 %v827, %v832
    %834 = vset.pattern.permute.xlu0 34
    %835 = vperm.xlu0 %834, %v611
    %v836 = vpop.permute.xlu0 %835
    %v838 = vlaneseq
    %v839 = vshrl.u32 %v838, 7
    %v840 = vsub.s32 2, %v839
    %v841 = vrot.slane %v685, %v840
    %v842 = vadd.f32 %v836, %v841
    %v843 = vmul.f32 %v842, 0.2
    %v844 = vmax.f32 %v842, %v843
    %v845 = vadd.f32 %v844, %v700
    %v846 = vsel %vm231, %v845, -inf
    %847 = vmax.xlane.f32.xlu0 %v846
    %v848 = vpop.xlane.xlu0 %847
    %v849 = vsub.f32 %v845, %v848
    %v850 = vmul.f32 %v849, 1.442695
    %v851 = vpow.pop %v850
    %v852 = vsel %vm231, %v851, 0.0
    %853 = vadd.xlane.f32.xlu0 %v852
    %v854 = vpop.xlane.xlu0 %853
    %v855 = vpack.c.bf16 %v851, %v851
    %856 = vrot.lane.b32.xlu0 %v711, 112
    %v857 = vpop.permute.xlu0 %856
    %v859 = vsel %vm231, %v855, 0
    %v862 = vsel %vm246, %v857, 0
    %864 = vmatprep.subr.bf16.mxu0 0
    %865 = vmatpush1.bf16.msra.mxu0 %v862
    %866 = vmatprep.subr.bf16.mxu0 0
    %867 = vmatpush1.bf16.msra.mxu0 0
    %868 = vmatprep.subr.bf16.mxu0 0
    %869 = vmatpush1.bf16.msra.mxu0 0
    %870 = vmatprep.subr.bf16.mxu0 0
    %871 = vmatpush1.bf16.msra.mxu0 0
    %872 = vmatprep.subr.bf16.mxu0 0
    %873 = vmatpush1.bf16.msra.mxu0 0
    %874 = vmatprep.subr.bf16.mxu0 0
    %875 = vmatpush1.bf16.msra.mxu0 0
    %876 = vmatprep.subr.bf16.mxu0 0
    %877 = vmatpush1.bf16.msra.mxu0 0
    %878 = vmatprep.subr.bf16.mxu0 0
    %879 = vmatpush1.bf16.msra.mxu0 0
    %880 = vmatprep.subr.bf16.mxu0 0
    %881 = vmatpush1.bf16.msra.mxu0 0
    %882 = vmatprep.subr.bf16.mxu0 0
    %883 = vmatpush1.bf16.msra.mxu0 0
    %884 = vmatprep.subr.bf16.mxu0 0
    %885 = vmatpush1.bf16.msra.mxu0 0
    %886 = vmatprep.subr.bf16.mxu0 0
    %887 = vmatpush1.bf16.msra.mxu0 0
    %888 = vmatprep.subr.bf16.mxu0 0
    %889 = vmatpush1.bf16.msra.mxu0 0
    %890 = vmatprep.subr.bf16.mxu0 0
    %891 = vmatpush1.bf16.msra.mxu0 0
    %892 = vmatprep.subr.bf16.mxu0 0
    %893 = vmatpush1.bf16.msra.mxu0 0
    %894 = vmatprep.subr.bf16.mxu0 0
    %895 = vmatpush1.bf16.msra.mxu0 0
    %896 = vmatprep.mubr.bf16.mxu0 0
    %897 = vmatmul.mubr.bf16.gmra.mrb[0].mxu0 %v859
    %v898 = vpop.f32.mrb[0].mxu0
    %v899 = vadd.f32 0.0, %v898
    %v900 = vpop.f32.mrb[0].mxu0
    %v901 = vpop.f32.mrb[0].mxu0
    %v902 = vpop.f32.mrb[0].mxu0
    %903 = vdwg.mxu0
    %v904 = vrcp.pop %v854
    %v905 = vmul.f32 %v899, %v904
    %906 = vset.pattern.permute.xlu0 35
    %907 = vperm.xlu0 %906, %v611
    %v908 = vpop.permute.xlu0 %907
    %v910 = vlaneseq
    %v911 = vshrl.u32 %v910, 7
    %v912 = vsub.s32 3, %v911
    %v913 = vrot.slane %v685, %v912
    %v914 = vadd.f32 %v908, %v913
    %v915 = vmul.f32 %v914, 0.2
    %v916 = vmax.f32 %v914, %v915
    %v917 = vadd.f32 %v916, %v700
    %v918 = vsel %vm231, %v917, -inf
    %919 = vmax.xlane.f32.xlu0 %v918
    %v920 = vpop.xlane.xlu0 %919
    %v921 = vsub.f32 %v917, %v920
    %v922 = vmul.f32 %v921, 1.442695
    %v923 = vpow.pop %v922
    %v924 = vsel %vm231, %v923, 0.0
    %925 = vadd.xlane.f32.xlu0 %v924
    %v926 = vpop.xlane.xlu0 %925
    %v927 = vpack.c.bf16 %v923, %v923
    %928 = vrot.lane.b32.xlu0 %v711, 104
    %v929 = vpop.permute.xlu0 %928
    %v931 = vsel %vm231, %v927, 0
    %v934 = vsel %vm246, %v929, 0
    %936 = vmatprep.subr.bf16.mxu0 0
    %937 = vmatpush1.bf16.msra.mxu0 %v934
    %938 = vmatprep.subr.bf16.mxu0 0
    %939 = vmatpush1.bf16.msra.mxu0 0
    %940 = vmatprep.subr.bf16.mxu0 0
    %941 = vmatpush1.bf16.msra.mxu0 0
    %942 = vmatprep.subr.bf16.mxu0 0
    %943 = vmatpush1.bf16.msra.mxu0 0
    %944 = vmatprep.subr.bf16.mxu0 0
    %945 = vmatpush1.bf16.msra.mxu0 0
    %946 = vmatprep.subr.bf16.mxu0 0
    %947 = vmatpush1.bf16.msra.mxu0 0
    %948 = vmatprep.subr.bf16.mxu0 0
    %949 = vmatpush1.bf16.msra.mxu0 0
    %950 = vmatprep.subr.bf16.mxu0 0
    %951 = vmatpush1.bf16.msra.mxu0 0
    %952 = vmatprep.subr.bf16.mxu0 0
    %953 = vmatpush1.bf16.msra.mxu0 0
    %954 = vmatprep.subr.bf16.mxu0 0
    %955 = vmatpush1.bf16.msra.mxu0 0
    %956 = vmatprep.subr.bf16.mxu0 0
    %957 = vmatpush1.bf16.msra.mxu0 0
    %958 = vmatprep.subr.bf16.mxu0 0
    %959 = vmatpush1.bf16.msra.mxu0 0
    %960 = vmatprep.subr.bf16.mxu0 0
    %961 = vmatpush1.bf16.msra.mxu0 0
    %962 = vmatprep.subr.bf16.mxu0 0
    %963 = vmatpush1.bf16.msra.mxu0 0
    %964 = vmatprep.subr.bf16.mxu0 0
    %965 = vmatpush1.bf16.msra.mxu0 0
    %966 = vmatprep.subr.bf16.mxu0 0
    %967 = vmatpush1.bf16.msra.mxu0 0
    %968 = vmatprep.mubr.bf16.mxu0 0
    %969 = vmatmul.mubr.bf16.gmra.mrb[0].mxu0 %v931
    %v970 = vpop.f32.mrb[0].mxu0
    %v971 = vadd.f32 0.0, %v970
    %v972 = vpop.f32.mrb[0].mxu0
    %v973 = vpop.f32.mrb[0].mxu0
    %v974 = vpop.f32.mrb[0].mxu0
    %975 = vdwg.mxu0
    %v976 = vrcp.pop %v926
    %v977 = vmul.f32 %v971, %v976
    %979 = vrot.lane.b32.xlu0 %v833, 8
    %v980 = vpop.permute.xlu0 %979
    %983 = vrot.lane.b32.xlu0 %v905, 16
    %v984 = vpop.permute.xlu0 %983
    %987 = vrot.lane.b32.xlu0 %v977, 24
    %v988 = vpop.permute.xlu0 %987
    %v990 = vsel %vm231, %v760, %v980
    %v991 = vsel %vm542, %v990, %v984
    %v992 = vsel %vm544, %v991, %v988
    %993 = vst.msk [vmem:[#allocation13] sm:$0xff] %vm93, %v992
    // Predicated region
    $region42: #{tpu_custom_call.1} parent=1 // pred_check
      _
    $region43: #{tpu_custom_call.1} parent=1 // pred_check_branch
      %995 = sbr.rel (0) target = $region45
    $region44: #{tpu_custom_call.1} parent=1 // pred_region
      %s997 = ssub.s32 128, 128
      %998 = vsyncadd [#allocation7], %s997
      %s1000 = sshll.u32 [#allocation13], 4
      %s1001 = int_to_ptr.vmem [resolvable:$true] %s1000
      %1003 = dma.vmem_to_hbm [thread:$0]  %s1001, 128, %s6, [#allocation7]
    $region45: #{tpu_custom_call.1} parent=1 // pred_fallthru
      _
    // Predicated region
    $region46: #{tpu_custom_call.1} parent=1 // pred_check
      _
    $region47: #{tpu_custom_call.1} parent=1 // pred_check_branch
      %1005 = sbr.rel (0) target = $region49
    $region48: #{tpu_custom_call.1} parent=1 // pred_region
      %1006 = dma.done [#allocation7], 128
    $region49: #{tpu_custom_call.1} parent=1 // pred_fallthru
      _
    %1007 = vsyncpa [#allocation6], 1
    %1008 = vsyncpa [#allocation9], 1
    %1009 = vsyncpa [#allocation12], 1
    %1010 = vsyncpa [#allocation7], 1

</llo_original>
